<compile_context>
chip_gen: v7x
topology: tpu7x:2x2x1
jax: 0.10.0
libtpu: 0.0.40
codegen_flags: <defaults>
</compile_context>

<pallas_src>
import functools
import math

import jax
import jax.numpy as jnp
from jax.experimental import pallas as pl
from jax.experimental.pallas import tpu as pltpu


# --------------------------------------------------------------------------
# tiling helper
# --------------------------------------------------------------------------

def _tile(n, cap):
    """Largest tile <= cap that divides n and is a multiple of 8, else n."""
    if n <= cap:
        return n
    for t in range(cap, 7, -1):
        if n % t == 0 and t % 8 == 0:
            return t
    return n  # full-axis fallback (see TODO above)


# --------------------------------------------------------------------------
# fused MAB kernel
#   out = O + relu(O @ wo + bo),   O = Q + MHA(Q, K, V)
#   Q = xq @ wq + bq,  [K|V] = y @ wkv + bkv
# --------------------------------------------------------------------------

def _mab_kernel(xq_ref, y_ref, wq_ref, bq_ref, wkv_ref, bkv_ref, wo_ref, bo_ref,
                o_ref, *scratch, num_heads, dim, scale, n_kv):
    dh = dim // num_heads

    def project_q():
        return (jnp.dot(xq_ref[0], wq_ref[...],
                        preferred_element_type=jnp.float32) + bq_ref[...])

    def project_kv():
        kv = (jnp.dot(y_ref[0], wkv_ref[...],
                      preferred_element_type=jnp.float32) + bkv_ref[...])
        return kv[:, :dim], kv[:, dim:]

    def epilogue(o):  # o = Q + attn, f32 (tq, dim)
        y = jnp.dot(o, wo_ref[...], preferred_element_type=jnp.float32)
        y = jnp.maximum(y + bo_ref[...], 0.0)                  # ReLU(fc_o(O))
        return (o + y).astype(o_ref.dtype)

    if n_kv == 1:
        # ---- one-pass softmax: whole KV axis resident, no scratch ----------
        q = project_q()                                        # (tq, dim) f32
        k, v = project_kv()                                    # (tk, dim) each
        qs = q * scale                                         # pre-scaled Q
        heads = []
        for h in range(num_heads):
            sl = slice(h * dh, (h + 1) * dh)
            s = jax.lax.dot_general(                           # (tq, tk)
                qs[:, sl], k[:, sl],
                dimension_numbers=(((1,), (1,)), ((), ())),
                preferred_element_type=jnp.float32)
            p = jnp.exp(s - s.max(axis=-1, keepdims=True))
            o_h = jnp.dot(p, v[:, sl], preferred_element_type=jnp.float32)
            o_h = o_h * pl.reciprocal(p.sum(axis=-1, keepdims=True), approx=True)
            heads.append(o_h)
        o_ref[0] = epilogue(q + jnp.concatenate(heads, axis=-1))
    else:
        # ---- online-softmax (flash) accumulation across kv tiles -----------
        q_sc, m_sc, l_sc, acc_sc = scratch
        ki = pl.program_id(2)

        @pl.when(ki == 0)
        def _():
            q_sc[...] = project_q()
            m_sc[...] = jnp.full_like(m_sc, -jnp.inf)
            l_sc[...] = jnp.zeros_like(l_sc)
            acc_sc[...] = jnp.zeros_like(acc_sc)

        k, v = project_kv()
        qs = q_sc[...] * scale
        m_prev = m_sc[...]                                     # (tq, H)
        l_prev = l_sc[...]                                     # (tq, H)
        acc_prev = acc_sc[...]                                 # (tq, dim)
        new_m, new_l, new_acc = [], [], []
        for h in range(num_heads):
            sl = slice(h * dh, (h + 1) * dh)
            s = jax.lax.dot_general(                           # (tq, tk)
                qs[:, sl], k[:, sl],
                dimension_numbers=(((1,), (1,)), ((), ())),
                preferred_element_type=jnp.float32)
            m_p = m_prev[:, h:h + 1]
            m_n = jnp.maximum(m_p, s.max(axis=-1, keepdims=True))
            alpha = jnp.exp(m_p - m_n)
            p = jnp.exp(s - m_n)
            new_m.append(m_n)
            new_l.append(alpha * l_prev[:, h:h + 1] + p.sum(axis=-1, keepdims=True))
            new_acc.append(alpha * acc_prev[:, sl]
                           + jnp.dot(p, v[:, sl], preferred_element_type=jnp.float32))
        m_sc[...] = jnp.concatenate(new_m, axis=-1)
        l_sc[...] = jnp.concatenate(new_l, axis=-1)
        acc_sc[...] = jnp.concatenate(new_acc, axis=-1)

        @pl.when(ki == n_kv - 1)
        def _():
            l = l_sc[...]
            acc = acc_sc[...]
            parts = [acc[:, h * dh:(h + 1) * dh]
                     * pl.reciprocal(l[:, h:h + 1], approx=True)
                     for h in range(num_heads)]
            o_ref[0] = epilogue(q_sc[...] + jnp.concatenate(parts, axis=-1))


def fused_mab(Xq, Y, p, *, num_heads, dim, q_tile_cap=128, kv_tile_cap=512):
    """One fused MAB.  Xq: (1 or B, Lq, dim_X) queries input; Y: (B, Lk, dim_Y)."""
    xq_b, lq, dim_x = Xq.shape
    b, lk, dim_y = Y.shape
    tq = _tile(lq, q_tile_cap)
    tk = _tile(lk, kv_tile_cap)
    n_q, n_kv = lq // tq, lk // tk
    scale = 1.0 / math.sqrt(dim)                 # MultiCompat: sqrt(FULL dim)

    wkv = jnp.concatenate([p["wk"], p["wv"]], axis=1)           # (dim_y, 2*dim)
    bkv = jnp.concatenate([p["bk"], p["bv"]], axis=0).reshape(1, 2 * dim)
    b_q = p["bq"].reshape(1, dim)
    b_o = p["bo"].reshape(1, dim)

    if xq_b == 1:                 # batch-independent queries (PMA's inducing points)
        xq_map = lambda bb, qi, ki: (0, qi, 0)
    else:
        xq_map = lambda bb, qi, ki: (bb, qi, 0)

    scratch = []
    if n_kv > 1:
        scratch = [
            pltpu.VMEM((tq, dim), jnp.float32),         # Q tile (unscaled)
            pltpu.VMEM((tq, num_heads), jnp.float32),   # running max per head
            pltpu.VMEM((tq, num_heads), jnp.float32),   # running denom per head
            pltpu.VMEM((tq, dim), jnp.float32),         # running numerator
        ]

    itemsize = Xq.dtype.itemsize
    flops = int(2 * b * lq * dim_x * dim                       # fc_q
                + 2 * b * lk * dim_y * 2 * dim * n_q           # fused fc_k | fc_v
                + 4 * b * lq * lk * dim                        # QK^T and P@V
                + 2 * b * lq * dim * dim)                      # fc_o
    bytes_accessed = int(itemsize * ((b if xq_b > 1 else 1) * lq * dim_x
                                     + b * lk * dim_y
                                     + dim_x * dim + dim_y * 2 * dim + dim * dim
                                     + 4 * dim
                                     + b * lq * dim))

    return pl.pallas_call(
        functools.partial(_mab_kernel, num_heads=num_heads, dim=dim,
                          scale=scale, n_kv=n_kv),
        out_shape=jax.ShapeDtypeStruct((b, lq, dim), Xq.dtype),
        grid_spec=pltpu.PrefetchScalarGridSpec(
            num_scalar_prefetch=0,
            grid=(b, n_q, n_kv),                # kv innermost ("arbitrary")
            in_specs=[
                pl.BlockSpec((1, tq, dim_x), xq_map),
                pl.BlockSpec((1, tk, dim_y), lambda bb, qi, ki: (bb, ki, 0)),
                pl.BlockSpec((dim_x, dim), lambda bb, qi, ki: (0, 0)),
                pl.BlockSpec((1, dim), lambda bb, qi, ki: (0, 0)),
                pl.BlockSpec((dim_y, 2 * dim), lambda bb, qi, ki: (0, 0)),
                pl.BlockSpec((1, 2 * dim), lambda bb, qi, ki: (0, 0)),
                pl.BlockSpec((dim, dim), lambda bb, qi, ki: (0, 0)),
                pl.BlockSpec((1, dim), lambda bb, qi, ki: (0, 0)),
            ],
            out_specs=pl.BlockSpec((1, tq, dim), lambda bb, qi, ki: (bb, qi, 0)),
            scratch_shapes=scratch,
        ),
        compiler_params=pltpu.CompilerParams(
            dimension_semantics=("parallel", "parallel", "arbitrary"),
            vmem_limit_bytes=32 << 20,
        ),
        cost_estimate=pl.CostEstimate(
            flops=flops,
            transcendentals=int(b * num_heads * lq * lk),
            bytes_accessed=bytes_accessed,
        ),
    )(Xq, Y, p["wq"], b_q, wkv, bkv, p["wo"], b_o)


# --------------------------------------------------------------------------
# ISAB forward (defaults: ln=False, p=None, compat='multi')
# --------------------------------------------------------------------------

def isab_forward(X, params, num_heads, dim, *, kv_tile_cap=512):
    # PMA: queries come straight from the (1, num_inds, dim) inducing points.
    H = fused_mab(params["I"], X, params["pma_mab"],
                  num_heads=num_heads, dim=dim, kv_tile_cap=kv_tile_cap)
    # MAB2: queries from X, keys/values from the induced set H.
    return fused_mab(X, H, params["mab"],
                     num_heads=num_heads, dim=dim, kv_tile_cap=kv_tile_cap)


# --------------------------------------------------------------------------
# parameter init + plain-JAX reference for the correctness check
# --------------------------------------------------------------------------

def _init_linear(key, din, dout, dtype=jnp.float32):
    kw, kb = jax.random.split(key)
    bound = 1.0 / math.sqrt(din)
    w = jax.random.uniform(kw, (din, dout), dtype, -bound, bound)
    b = jax.random.uniform(kb, (dout,), dtype, -bound, bound)
    return w, b


def init_mab_params(key, dim_q_in, dim_kv_in, dim, dtype=jnp.float32):
    ks = jax.random.split(key, 4)
    wq, bq = _init_linear(ks[0], dim_q_in, dim, dtype)
    wk, bk = _init_linear(ks[1], dim_kv_in, dim, dtype)
    wv, bv = _init_linear(ks[2], dim_kv_in, dim, dtype)
    wo, bo = _init_linear(ks[3], dim, dim, dtype)
    return dict(wq=wq, bq=bq, wk=wk, bk=bk, wv=wv, bv=bv, wo=wo, bo=bo)


def init_isab_params(key, dim_X, dim, num_inds, dtype=jnp.float32):
    k_i, k_pma, k_mab = jax.random.split(key, 3)
    bound = math.sqrt(6.0 / (num_inds + dim))                  # xavier_uniform
    I = jax.random.uniform(k_i, (1, num_inds, dim), dtype, -bound, bound)
    return dict(
        I=I,
        pma_mab=init_mab_params(k_pma, dim, dim_X, dim, dtype),  # MAB(dim, dim_X, dim)
        mab=init_mab_params(k_mab, dim_X, dim, dim, dtype),      # MAB(dim_X, dim, dim)
    )


def _mab_ref(X, Y, p, num_heads, dim):
    Q = X @ p["wq"] + p["bq"]
    K = Y @ p["wk"] + p["bk"]
    V = Y @ p["wv"] + p["bv"]
    Q_ = jnp.concatenate(jnp.split(Q, num_heads, axis=-1), axis=0)
    K_ = jnp.concatenate(jnp.split(K, num_heads, axis=-1), axis=0)
    V_ = jnp.concatenate(jnp.split(V, num_heads, axis=-1), axis=0)
    A = jax.nn.softmax(
        jnp.einsum("bqd,bkd->bqk", Q_, K_) / math.sqrt(dim), axis=-1)
    attn = jnp.concatenate(jnp.split(A @ V_, num_heads, axis=0), axis=-1)
    O = Q + attn
    O = O + jax.nn.relu(O @ p["wo"] + p["bo"])
    return O


def _isab_ref(X, params, num_heads, dim):
    B = X.shape[0]
    num_inds = params["I"].shape[1]
    I_b = jnp.broadcast_to(params["I"], (B, num_inds, dim))
    H = _mab_ref(I_b, X, params["pma_mab"], num_heads, dim)
    return _mab_ref(X, H, params["mab"], num_heads, dim)


# --------------------------------------------------------------------------

if __name__ == "__main__":
    B, N, dim_X, dim, num_inds, num_heads = 2, 16, 32, 32, 8, 4

    key = jax.random.PRNGKey(0)
    k_params, k_x = jax.random.split(key)
    params = init_isab_params(k_params, dim_X, dim, num_inds)
    X = jax.random.normal(k_x, (B, N, dim_X), dtype=jnp.float32)

    ref = _isab_ref(X, params, num_heads, dim)

    # One-pass-softmax path (whole KV axis resident per batch).
    out = jax.block_until_ready(isab_forward(X, params, num_heads, dim))
    assert out.shape == (B, N, dim)
    assert jnp.allclose(out, ref, atol=5e-3, rtol=5e-3), (
        f"one-pass mismatch, max abs diff = {jnp.max(jnp.abs(out - ref))}")

    # Force multiple KV tiles to exercise the online-softmax (flash) path too.
    out2 = jax.block_until_ready(
        isab_forward(X, params, num_heads, dim, kv_tile_cap=8))
    assert jnp.allclose(out2, ref, atol=5e-3, rtol=5e-3), (
        f"flash-path mismatch, max abs diff = {jnp.max(jnp.abs(out2 - ref))}")

    print("KERNEL_OK")
</pallas_src>

<mosaic_0001>
module attributes {stable_mosaic.version = 11 : i64} {
  func.func @_mab_kernel(%arg0: i32, %arg1: i32, %arg2: i32, %arg3: memref<1x8x32xf32, #tpu.memory_space<vmem>>, %arg4: memref<1x16x32xf32, #tpu.memory_space<vmem>>, %arg5: memref<32x32xf32, #tpu.memory_space<vmem>>, %arg6: memref<1x32xf32, #tpu.memory_space<vmem>>, %arg7: memref<32x64xf32, #tpu.memory_space<vmem>>, %arg8: memref<1x64xf32, #tpu.memory_space<vmem>>, %arg9: memref<32x32xf32, #tpu.memory_space<vmem>>, %arg10: memref<1x32xf32, #tpu.memory_space<vmem>>, %arg11: memref<1x8x32xf32, #tpu.memory_space<vmem>>) attributes {dimension_semantics = [#tpu.dimension_semantics<parallel>, #tpu.dimension_semantics<parallel>, #tpu.dimension_semantics<arbitrary>], iteration_bounds = array<i64: 2, 1, 1>, scalar_prefetch = 0 : i64, scratch_operands = 0 : i64, tpu.core_type = #tpu.core_type<tc>, window_params = [{transform_indices = @transform_0, window_bounds = array<i64: 1, 8, 32>}, {transform_indices = @transform_1, window_bounds = array<i64: 1, 16, 32>}, {pipeline_mode = #tpu.pipeline_mode<synchronous>, transform_indices = @transform_2, window_bounds = array<i64: 32, 32>}, {pipeline_mode = #tpu.pipeline_mode<synchronous>, transform_indices = @transform_3, window_bounds = array<i64: 1, 32>}, {pipeline_mode = #tpu.pipeline_mode<synchronous>, transform_indices = @transform_4, window_bounds = array<i64: 32, 64>}, {pipeline_mode = #tpu.pipeline_mode<synchronous>, transform_indices = @transform_5, window_bounds = array<i64: 1, 64>}, {pipeline_mode = #tpu.pipeline_mode<synchronous>, transform_indices = @transform_6, window_bounds = array<i64: 32, 32>}, {pipeline_mode = #tpu.pipeline_mode<synchronous>, transform_indices = @transform_7, window_bounds = array<i64: 1, 32>}, {transform_indices = @transform_8, window_bounds = array<i64: 1, 8, 32>}]} {
    %c0 = arith.constant 0 : index
    %c0_0 = arith.constant 0 : index
    %c0_1 = arith.constant 0 : index
    %0 = vector.load %arg3[%c0, %c0_0, %c0_1] : memref<1x8x32xf32, #tpu.memory_space<vmem>>, vector<1x8x32xf32>
    %1 = vector.shape_cast %0 : vector<1x8x32xf32> to vector<8x32xf32>
    %c0_2 = arith.constant 0 : index
    %c0_3 = arith.constant 0 : index
    %2 = vector.load %arg5[%c0_2, %c0_3] : memref<32x32xf32, #tpu.memory_space<vmem>>, vector<32x32xf32>
    %cst = arith.constant dense<0.000000e+00> : vector<8x32xf32>
    %3 = tpu.matmul %1, %2, %cst {dimension_numbers = #tpu.dot_dimension_numbers<[1], [0], [0], [1], [0, 0, 1, 1], [], []>} : vector<8x32xf32>, vector<32x32xf32>, vector<8x32xf32> -> vector<8x32xf32>
    %c0_4 = arith.constant 0 : index
    %c0_5 = arith.constant 0 : index
    %4 = vector.load %arg6[%c0_4, %c0_5] : memref<1x32xf32, #tpu.memory_space<vmem>>, vector<1x32xf32>
    %5 = vector.broadcast %4 : vector<1x32xf32> to vector<8x32xf32>
    %6 = arith.addf %3, %5 : vector<8x32xf32>
    %c0_6 = arith.constant 0 : index
    %c0_7 = arith.constant 0 : index
    %c0_8 = arith.constant 0 : index
    %7 = vector.load %arg4[%c0_6, %c0_7, %c0_8] : memref<1x16x32xf32, #tpu.memory_space<vmem>>, vector<1x16x32xf32>
    %8 = vector.shape_cast %7 : vector<1x16x32xf32> to vector<16x32xf32>
    %c0_9 = arith.constant 0 : index
    %c0_10 = arith.constant 0 : index
    %9 = vector.load %arg7[%c0_9, %c0_10] : memref<32x64xf32, #tpu.memory_space<vmem>>, vector<32x64xf32>
    %cst_11 = arith.constant dense<0.000000e+00> : vector<16x64xf32>
    %10 = tpu.matmul %8, %9, %cst_11 {dimension_numbers = #tpu.dot_dimension_numbers<[1], [0], [0], [1], [0, 0, 1, 1], [], []>} : vector<16x32xf32>, vector<32x64xf32>, vector<16x64xf32> -> vector<16x64xf32>
    %c0_12 = arith.constant 0 : index
    %c0_13 = arith.constant 0 : index
    %11 = vector.load %arg8[%c0_12, %c0_13] : memref<1x64xf32, #tpu.memory_space<vmem>>, vector<1x64xf32>
    %12 = vector.broadcast %11 : vector<1x64xf32> to vector<16x64xf32>
    %13 = arith.addf %10, %12 : vector<16x64xf32>
    %14 = vector.extract_strided_slice %13 {offsets = [0, 0], sizes = [16, 32], strides = [1, 1]} : vector<16x64xf32> to vector<16x32xf32>
    %15 = vector.extract_strided_slice %13 {offsets = [0, 32], sizes = [16, 32], strides = [1, 1]} : vector<16x64xf32> to vector<16x32xf32>
    %cst_14 = arith.constant 0.176776692 : f32
    %16 = vector.broadcast %cst_14 : f32 to vector<8x32xf32>
    %17 = arith.mulf %6, %16 : vector<8x32xf32>
    %18 = vector.extract_strided_slice %17 {offsets = [0, 0], sizes = [8, 8], strides = [1, 1]} : vector<8x32xf32> to vector<8x8xf32>
    %19 = vector.extract_strided_slice %14 {offsets = [0, 0], sizes = [16, 8], strides = [1, 1]} : vector<16x32xf32> to vector<16x8xf32>
    %cst_15 = arith.constant dense<0.000000e+00> : vector<8x16xf32>
    %20 = tpu.matmul %18, %19, %cst_15 {dimension_numbers = #tpu.dot_dimension_numbers<[1], [1], [0], [0], [0, 0, 1, 0], [], []>} : vector<8x8xf32>, vector<16x8xf32>, vector<8x16xf32> -> vector<8x16xf32>
    %cst_16 = arith.constant dense<0xFF800000> : vector<8xf32>
    %21 = vector.multi_reduction <maximumf>, %20, %cst_16 [1] : vector<8x16xf32> to vector<8xf32>
    %22 = vector.shape_cast %21 : vector<8xf32> to vector<8x1xf32>
    %23 = vector.broadcast %22 : vector<8x1xf32> to vector<8x16xf32>
    %24 = arith.subf %20, %23 : vector<8x16xf32>
    %25 = math.exp %24 : vector<8x16xf32>
    %26 = vector.extract_strided_slice %15 {offsets = [0, 0], sizes = [16, 8], strides = [1, 1]} : vector<16x32xf32> to vector<16x8xf32>
    %cst_17 = arith.constant dense<0.000000e+00> : vector<8x8xf32>
    %27 = tpu.matmul %25, %26, %cst_17 {dimension_numbers = #tpu.dot_dimension_numbers<[1], [0], [0], [1], [0, 0, 1, 1], [], []>} : vector<8x16xf32>, vector<16x8xf32>, vector<8x8xf32> -> vector<8x8xf32>
    %cst_18 = arith.constant dense<0.000000e+00> : vector<8xf32>
    %28 = vector.multi_reduction <add>, %25, %cst_18 [1] : vector<8x16xf32> to vector<8xf32>
    %29 = vector.shape_cast %28 : vector<8xf32> to vector<8x1xf32>
    %30 = tpu.reciprocal %29 {approx = true} : vector<8x1xf32> -> vector<8x1xf32>
    %31 = vector.broadcast %30 : vector<8x1xf32> to vector<8x8xf32>
    %32 = arith.mulf %27, %31 : vector<8x8xf32>
    %33 = vector.extract_strided_slice %17 {offsets = [0, 8], sizes = [8, 8], strides = [1, 1]} : vector<8x32xf32> to vector<8x8xf32>
    %34 = vector.extract_strided_slice %14 {offsets = [0, 8], sizes = [16, 8], strides = [1, 1]} : vector<16x32xf32> to vector<16x8xf32>
    %cst_19 = arith.constant dense<0.000000e+00> : vector<8x16xf32>
    %35 = tpu.matmul %33, %34, %cst_19 {dimension_numbers = #tpu.dot_dimension_numbers<[1], [1], [0], [0], [0, 0, 1, 0], [], []>} : vector<8x8xf32>, vector<16x8xf32>, vector<8x16xf32> -> vector<8x16xf32>
    %cst_20 = arith.constant dense<0xFF800000> : vector<8xf32>
    %36 = vector.multi_reduction <maximumf>, %35, %cst_20 [1] : vector<8x16xf32> to vector<8xf32>
    %37 = vector.shape_cast %36 : vector<8xf32> to vector<8x1xf32>
    %38 = vector.broadcast %37 : vector<8x1xf32> to vector<8x16xf32>
    %39 = arith.subf %35, %38 : vector<8x16xf32>
    %40 = math.exp %39 : vector<8x16xf32>
    %41 = vector.extract_strided_slice %15 {offsets = [0, 8], sizes = [16, 8], strides = [1, 1]} : vector<16x32xf32> to vector<16x8xf32>
    %cst_21 = arith.constant dense<0.000000e+00> : vector<8x8xf32>
    %42 = tpu.matmul %40, %41, %cst_21 {dimension_numbers = #tpu.dot_dimension_numbers<[1], [0], [0], [1], [0, 0, 1, 1], [], []>} : vector<8x16xf32>, vector<16x8xf32>, vector<8x8xf32> -> vector<8x8xf32>
    %cst_22 = arith.constant dense<0.000000e+00> : vector<8xf32>
    %43 = vector.multi_reduction <add>, %40, %cst_22 [1] : vector<8x16xf32> to vector<8xf32>
    %44 = vector.shape_cast %43 : vector<8xf32> to vector<8x1xf32>
    %45 = tpu.reciprocal %44 {approx = true} : vector<8x1xf32> -> vector<8x1xf32>
    %46 = vector.broadcast %45 : vector<8x1xf32> to vector<8x8xf32>
    %47 = arith.mulf %42, %46 : vector<8x8xf32>
    %48 = vector.extract_strided_slice %17 {offsets = [0, 16], sizes = [8, 8], strides = [1, 1]} : vector<8x32xf32> to vector<8x8xf32>
    %49 = vector.extract_strided_slice %14 {offsets = [0, 16], sizes = [16, 8], strides = [1, 1]} : vector<16x32xf32> to vector<16x8xf32>
    %cst_23 = arith.constant dense<0.000000e+00> : vector<8x16xf32>
    %50 = tpu.matmul %48, %49, %cst_23 {dimension_numbers = #tpu.dot_dimension_numbers<[1], [1], [0], [0], [0, 0, 1, 0], [], []>} : vector<8x8xf32>, vector<16x8xf32>, vector<8x16xf32> -> vector<8x16xf32>
    %cst_24 = arith.constant dense<0xFF800000> : vector<8xf32>
    %51 = vector.multi_reduction <maximumf>, %50, %cst_24 [1] : vector<8x16xf32> to vector<8xf32>
    %52 = vector.shape_cast %51 : vector<8xf32> to vector<8x1xf32>
    %53 = vector.broadcast %52 : vector<8x1xf32> to vector<8x16xf32>
    %54 = arith.subf %50, %53 : vector<8x16xf32>
    %55 = math.exp %54 : vector<8x16xf32>
    %56 = vector.extract_strided_slice %15 {offsets = [0, 16], sizes = [16, 8], strides = [1, 1]} : vector<16x32xf32> to vector<16x8xf32>
    %cst_25 = arith.constant dense<0.000000e+00> : vector<8x8xf32>
    %57 = tpu.matmul %55, %56, %cst_25 {dimension_numbers = #tpu.dot_dimension_numbers<[1], [0], [0], [1], [0, 0, 1, 1], [], []>} : vector<8x16xf32>, vector<16x8xf32>, vector<8x8xf32> -> vector<8x8xf32>
    %cst_26 = arith.constant dense<0.000000e+00> : vector<8xf32>
    %58 = vector.multi_reduction <add>, %55, %cst_26 [1] : vector<8x16xf32> to vector<8xf32>
    %59 = vector.shape_cast %58 : vector<8xf32> to vector<8x1xf32>
    %60 = tpu.reciprocal %59 {approx = true} : vector<8x1xf32> -> vector<8x1xf32>
    %61 = vector.broadcast %60 : vector<8x1xf32> to vector<8x8xf32>
    %62 = arith.mulf %57, %61 : vector<8x8xf32>
    %63 = vector.extract_strided_slice %17 {offsets = [0, 24], sizes = [8, 8], strides = [1, 1]} : vector<8x32xf32> to vector<8x8xf32>
    %64 = vector.extract_strided_slice %14 {offsets = [0, 24], sizes = [16, 8], strides = [1, 1]} : vector<16x32xf32> to vector<16x8xf32>
    %cst_27 = arith.constant dense<0.000000e+00> : vector<8x16xf32>
    %65 = tpu.matmul %63, %64, %cst_27 {dimension_numbers = #tpu.dot_dimension_numbers<[1], [1], [0], [0], [0, 0, 1, 0], [], []>} : vector<8x8xf32>, vector<16x8xf32>, vector<8x16xf32> -> vector<8x16xf32>
    %cst_28 = arith.constant dense<0xFF800000> : vector<8xf32>
    %66 = vector.multi_reduction <maximumf>, %65, %cst_28 [1] : vector<8x16xf32> to vector<8xf32>
    %67 = vector.shape_cast %66 : vector<8xf32> to vector<8x1xf32>
    %68 = vector.broadcast %67 : vector<8x1xf32> to vector<8x16xf32>
    %69 = arith.subf %65, %68 : vector<8x16xf32>
    %70 = math.exp %69 : vector<8x16xf32>
    %71 = vector.extract_strided_slice %15 {offsets = [0, 24], sizes = [16, 8], strides = [1, 1]} : vector<16x32xf32> to vector<16x8xf32>
    %cst_29 = arith.constant dense<0.000000e+00> : vector<8x8xf32>
    %72 = tpu.matmul %70, %71, %cst_29 {dimension_numbers = #tpu.dot_dimension_numbers<[1], [0], [0], [1], [0, 0, 1, 1], [], []>} : vector<8x16xf32>, vector<16x8xf32>, vector<8x8xf32> -> vector<8x8xf32>
    %cst_30 = arith.constant dense<0.000000e+00> : vector<8xf32>
    %73 = vector.multi_reduction <add>, %70, %cst_30 [1] : vector<8x16xf32> to vector<8xf32>
    %74 = vector.shape_cast %73 : vector<8xf32> to vector<8x1xf32>
    %75 = tpu.reciprocal %74 {approx = true} : vector<8x1xf32> -> vector<8x1xf32>
    %76 = vector.broadcast %75 : vector<8x1xf32> to vector<8x8xf32>
    %77 = arith.mulf %72, %76 : vector<8x8xf32>
    %78 = tpu.concatenate %32, %47, %62, %77 in 1 : vector<8x8xf32>, vector<8x8xf32>, vector<8x8xf32>, vector<8x8xf32> -> vector<8x32xf32>
    %79 = arith.addf %6, %78 : vector<8x32xf32>
    %c0_31 = arith.constant 0 : index
    %c0_32 = arith.constant 0 : index
    %80 = vector.load %arg9[%c0_31, %c0_32] : memref<32x32xf32, #tpu.memory_space<vmem>>, vector<32x32xf32>
    %cst_33 = arith.constant dense<0.000000e+00> : vector<8x32xf32>
    %81 = tpu.matmul %79, %80, %cst_33 {dimension_numbers = #tpu.dot_dimension_numbers<[1], [0], [0], [1], [0, 0, 1, 1], [], []>} : vector<8x32xf32>, vector<32x32xf32>, vector<8x32xf32> -> vector<8x32xf32>
    %c0_34 = arith.constant 0 : index
    %c0_35 = arith.constant 0 : index
    %82 = vector.load %arg10[%c0_34, %c0_35] : memref<1x32xf32, #tpu.memory_space<vmem>>, vector<1x32xf32>
    %83 = vector.broadcast %82 : vector<1x32xf32> to vector<8x32xf32>
    %84 = arith.addf %81, %83 : vector<8x32xf32>
    %cst_36 = arith.constant 0.000000e+00 : f32
    %85 = vector.broadcast %cst_36 : f32 to vector<8x32xf32>
    %86 = arith.maximumf %84, %85 : vector<8x32xf32>
    %87 = arith.addf %79, %86 : vector<8x32xf32>
    %c0_37 = arith.constant 0 : index
    %c0_38 = arith.constant 0 : index
    %c0_39 = arith.constant 0 : index
    %88 = vector.load %arg11[%c0_37, %c0_38, %c0_39] : memref<1x8x32xf32, #tpu.memory_space<vmem>>, vector<1x8x32xf32>
    %89 = vector.shape_cast %88 : vector<1x8x32xf32> to vector<8x32xf32>
    %90 = vector.shape_cast %87 : vector<8x32xf32> to vector<1x8x32xf32>
    tpu.vector_store %arg11[%c0_37, %c0_38, %c0_39], %90 {strides = array<i32>} : memref<1x8x32xf32, #tpu.memory_space<vmem>>, vector<1x8x32xf32>,
    return
  }
  func.func @transform_0(%arg0: i32, %arg1: i32, %arg2: i32) -> (i32, i32, i32) {
    %c0_i32 = arith.constant 0 : i32
    %c0_i32_0 = arith.constant 0 : i32
    %c0_i32_1 = arith.constant 0 : i32
    return %c0_i32, %arg1, %c0_i32_0 : i32, i32, i32
  }
  func.func @transform_1(%arg0: i32, %arg1: i32, %arg2: i32) -> (i32, i32, i32) {
    %c0_i32 = arith.constant 0 : i32
    %c0_i32_0 = arith.constant 0 : i32
    return %arg0, %arg2, %c0_i32 : i32, i32, i32
  }
  func.func @transform_2(%arg0: i32, %arg1: i32, %arg2: i32) -> (i32, i32) {
    %c0_i32 = arith.constant 0 : i32
    %c0_i32_0 = arith.constant 0 : i32
    %c0_i32_1 = arith.constant 0 : i32
    return %c0_i32, %c0_i32_0 : i32, i32
  }
  func.func @transform_3(%arg0: i32, %arg1: i32, %arg2: i32) -> (i32, i32) {
    %c0_i32 = arith.constant 0 : i32
    %c0_i32_0 = arith.constant 0 : i32
    %c0_i32_1 = arith.constant 0 : i32
    return %c0_i32, %c0_i32_0 : i32, i32
  }
  func.func @transform_4(%arg0: i32, %arg1: i32, %arg2: i32) -> (i32, i32) {
    %c0_i32 = arith.constant 0 : i32
    %c0_i32_0 = arith.constant 0 : i32
    %c0_i32_1 = arith.constant 0 : i32
    return %c0_i32, %c0_i32_0 : i32, i32
  }
  func.func @transform_5(%arg0: i32, %arg1: i32, %arg2: i32) -> (i32, i32) {
    %c0_i32 = arith.constant 0 : i32
    %c0_i32_0 = arith.constant 0 : i32
    %c0_i32_1 = arith.constant 0 : i32
    return %c0_i32, %c0_i32_0 : i32, i32
  }
  func.func @transform_6(%arg0: i32, %arg1: i32, %arg2: i32) -> (i32, i32) {
    %c0_i32 = arith.constant 0 : i32
    %c0_i32_0 = arith.constant 0 : i32
    %c0_i32_1 = arith.constant 0 : i32
    return %c0_i32, %c0_i32_0 : i32, i32
  }
  func.func @transform_7(%arg0: i32, %arg1: i32, %arg2: i32) -> (i32, i32) {
    %c0_i32 = arith.constant 0 : i32
    %c0_i32_0 = arith.constant 0 : i32
    %c0_i32_1 = arith.constant 0 : i32
    return %c0_i32, %c0_i32_0 : i32, i32
  }
  func.func @transform_8(%arg0: i32, %arg1: i32, %arg2: i32) -> (i32, i32, i32) {
    %c0_i32 = arith.constant 0 : i32
    %c0_i32_0 = arith.constant 0 : i32
    return %arg0, %arg1, %c0_i32 : i32, i32, i32
  }
}

</mosaic_0001>

<llo_original>
// kernel: tpu_custom_call.1
$region0: #{tpu_custom_call.1}
  #allocation0 [shape = 'u32[]', space=smem, size = 0x4, offset = 0x4, fixed_abs, tag = 'smem constant byte address 0x4 - core index']
  #allocation1 [shape = 'u32[144,128]{1,0:T(1,128)}', space=vmem, size = 0x12000, scoped, tag = 'internal scratch']
  %s0 = inlined_call_operand.hbm [shape: f32[1,8,32], index: 0, kind: input, shape index: {}]
  %s1 = inlined_call_operand.hbm [shape: f32[2,16,32], index: 1, kind: input, shape index: {}]
  %s2 = inlined_call_operand.hbm [shape: f32[32,32], index: 2, kind: input, shape index: {}]
  %s3 = inlined_call_operand.vmem [shape: f32[1,32], index: 3, kind: input, shape index: {}]
  %s4 = inlined_call_operand.hbm [shape: f32[32,64], index: 4, kind: input, shape index: {}]
  %s5 = inlined_call_operand.vmem [shape: f32[1,64], index: 5, kind: input, shape index: {}]
  %s6 = inlined_call_operand.hbm [shape: f32[32,32], index: 6, kind: input, shape index: {}]
  %s7 = inlined_call_operand.vmem [shape: f32[1,32], index: 7, kind: input, shape index: {}]
  %s8 = inlined_call_operand.hbm [shape: f32[2,8,32], index: 8, kind: output, shape index: {}]
  %s9 = sld [smem:[#allocation0]]
  $region85: #{tpu_custom_call.1} parent=0
    _
  %s11 = ssub.s32 1, %s9
  %s12 = scalar_select 0, %s11, %s9
  $region1: #{tpu_custom_call.1} parent=0
    #allocation2 [shape = 'u8[4096]{0}', space=vmem, size = 0x1000, scoped, tag = 'input window, operand 0, single buffered']
    #allocation3 [shape = 's32[2]{0}', space=sflag, size = 0x8, scoped, tag = 'scoped memory for tpu_custom_call.1']
    #allocation4 [shape = 's32[2]{0}', space=sflag, size = 0x8, scoped, tag = 'scoped memory for tpu_custom_call.1']
    #allocation5 [shape = 'u8[16384]{0}', space=vmem, size = 0x4000, scoped, tag = 'input window, operand 1']
    #allocation6 [shape = 's32[2]{0}', space=sflag, size = 0x8, scoped, tag = 'scoped memory for tpu_custom_call.1']
    #allocation7 [shape = 'u8[16384]{0}', space=vmem, size = 0x4000, scoped, tag = 'input window, operand 2, single buffered']
    #allocation8 [shape = 'u8[16384]{0}', space=vmem, size = 0x4000, scoped, tag = 'input window, operand 4, single buffered']
    #allocation9 [shape = 's32[1]{0}', space=sflag, size = 0x4, scoped, tag = 'scoped memory for tpu_custom_call.1']
    #allocation10 [shape = 'u8[16384]{0}', space=vmem, size = 0x4000, scoped, tag = 'input window, operand 6, single buffered']
    #allocation11 [shape = 'u8[8192]{0}', space=vmem, size = 0x2000, scoped, tag = 'output window, operand 0']
    %13 = vsyncpa [#allocation3], 0
    %14 = vsyncpa [#allocation6], 0
    %s15 = scalar_lea.sflag [#allocation6], 1
    %16 = vsyncpa %s15, 0
    %17 = vsyncpa [#allocation9], 0
    %18 = vsyncpa [#allocation4], 0
    %s19 = scalar_lea.sflag [#allocation4], 1
    %20 = vsyncpa %s19, 0
    loop: start=0, step=1, limit=4
    $region2: #{tpu_custom_call.1} parent=1 // loop_pre_header
      _
    $region3: #{tpu_custom_call.1} parent=1 // loop_header
      %s22 = sphi 0, %s26
      %p23 = scmp.ge.s32.totalorder %s22, 4
      %s29 = sphi 0, %s48
      %s30 = sphi 0, %s44
      %s31 = sphi 0, %s40
      %s32 = sphi 0, %s29
      %s33 = sphi 0, %s30
      %s34 = sphi 0, %s31
      %s35 = sphi 0, %s32
      %s36 = sphi 0, %s33
      %s37 = sphi 0, %s34
      %s51 = sphi 0, %s53
      %s54 = sphi 0, %s51
      %s55 = sphi 0, %s54
      %s71 = sphi 0, %s55
      %s79 = sphi 0, %s81
      %s82 = sphi 0, %s79
      %s83 = sphi 0, %s82
      %s99 = sphi 0, %s83
      %s103 = sphi 0, %s103
      %s105 = sphi 0, %s103
      %s106 = sphi 0, %s105
      %s120 = sphi 0, %s106
      %s124 = sphi 0, %s124
      %s126 = sphi 0, %s124
      %s127 = sphi 0, %s126
      %s141 = sphi 0, %s127
      %s145 = sphi 0, %s145
      %s147 = sphi 0, %s145
      %s148 = sphi 0, %s147
      %s162 = sphi 0, %s148
      %s166 = sphi 0, %s166
      %s168 = sphi 0, %s166
      %s169 = sphi 0, %s168
      %s183 = sphi 0, %s169
      %s187 = sphi 0, %s187
      %s189 = sphi 0, %s187
      %s190 = sphi 0, %s189
      %s204 = sphi 0, %s190
      %s208 = sphi 0, %s208
      %s210 = sphi 0, %s208
      %s211 = sphi 0, %s210
      %s225 = sphi 0, %s211
      %s233 = sphi 0, %s235
      %s236 = sphi 0, %s233
      %s237 = sphi 0, %s236
      %s253 = sphi 0, %s237
    $region4: #{tpu_custom_call.1} parent=1 // loop_header_branch
      %25 = sbr.rel (%p23) target = $region8
    $region5: #{tpu_custom_call.1} parent=1 // loop_body
      %s27 = ssub.s32 %s22, 1
      %s28 = ssub.s32 %s22, 2
      %s38 = sadd.s32 1, %s31
      %p39 = scmp.ge.s32.totalorder %s38, 1
      %s40 = scalar_select %p39, 0, %s38
      %s41 = sadd.s32 1, %s30
      %s42 = scalar_select %p39, %s41, %s30
      %p43 = scmp.ge.s32.totalorder %s42, 1
      %s44 = scalar_select %p43, 0, %s42
      %s45 = sadd.s32 1, %s29
      %s46 = scalar_select %p43, %s45, %s29
      %p47 = scmp.ge.s32.totalorder %s46, 2
      %s48 = scalar_select %p47, 0, %s46
      %s49 = ssub.s32 %s30, %s44
      %p50 = scmp.eq.s32.totalorder %s49, 0
      %s52 = sadd.s32 %s51, 1
      %s53 = scalar_select %p50, %s51, %s52
      %p56 = pneg %p50
      %p57 = scmp.eq.s32.totalorder %s22, 1
      %p58 = por %p56, %p57
      %p59 = scmp.ne.s32.totalorder %s51, %s54
      %p60 = scmp.eq.s32.totalorder %s22, 0
      %p61 = por %p59, %p60
      %p62 = scmp.ne.s32.totalorder %s51, %s54
      %p63 = scmp.eq.s32.totalorder %s27, 1
      %p64 = por %p62, %p63
      %p65 = scmp.ne.s32.totalorder %s54, %s55
      %p66 = scmp.eq.s32.totalorder %s27, 0
      %p67 = por %p65, %p66
      %p68 = scmp.ne.s32.totalorder %s54, %s55
      %p69 = scmp.eq.s32.totalorder %s28, 1
      %p70 = por %p68, %p69
      %p72 = scmp.ne.s32.totalorder %s55, %s71
      %p73 = scmp.eq.s32.totalorder %s28, 0
      %p74 = por %p72, %p73
      %s75 = ssub.s32 %s29, %s48
      %s76 = ssub.s32 %s31, %s40
      %s77 = sor.u32 %s75, %s76
      %p78 = scmp.eq.s32.totalorder %s77, 0
      %s80 = sadd.s32 %s79, 1
      %s81 = scalar_select %p78, %s79, %s80
      %p84 = pneg %p78
      %p85 = scmp.eq.s32.totalorder %s22, 1
      %p86 = por %p84, %p85
      %p87 = scmp.ne.s32.totalorder %s79, %s82
      %p88 = scmp.eq.s32.totalorder %s22, 0
      %p89 = por %p87, %p88
      %p90 = scmp.ne.s32.totalorder %s79, %s82
      %p91 = scmp.eq.s32.totalorder %s27, 1
      %p92 = por %p90, %p91
      %p93 = scmp.ne.s32.totalorder %s82, %s83
      %p94 = scmp.eq.s32.totalorder %s27, 0
      %p95 = por %p93, %p94
      %p96 = scmp.ne.s32.totalorder %s82, %s83
      %p97 = scmp.eq.s32.totalorder %s28, 1
      %p98 = por %p96, %p97
      %p100 = scmp.ne.s32.totalorder %s83, %s99
      %p101 = scmp.eq.s32.totalorder %s28, 0
      %p102 = por %p100, %p101
      %s104 = sadd.s32 %s103, 1
      %p107 = scmp.eq.s32.totalorder %s22, 1
      %p108 = scmp.ne.s32.totalorder %s103, %s105
      %p109 = scmp.eq.s32.totalorder %s22, 0
      %p110 = por %p108, %p109
      %p111 = scmp.ne.s32.totalorder %s103, %s105
      %p112 = scmp.eq.s32.totalorder %s27, 1
      %p113 = por %p111, %p112
      %p114 = scmp.ne.s32.totalorder %s105, %s106
      %p115 = scmp.eq.s32.totalorder %s27, 0
      %p116 = por %p114, %p115
      %p117 = scmp.ne.s32.totalorder %s105, %s106
      %p118 = scmp.eq.s32.totalorder %s28, 1
      %p119 = por %p117, %p118
      %p121 = scmp.ne.s32.totalorder %s106, %s120
      %p122 = scmp.eq.s32.totalorder %s28, 0
      %p123 = por %p121, %p122
      %s125 = sadd.s32 %s124, 1
      %p128 = scmp.eq.s32.totalorder %s22, 1
      %p129 = scmp.ne.s32.totalorder %s124, %s126
      %p130 = scmp.eq.s32.totalorder %s22, 0
      %p131 = por %p129, %p130
      %p132 = scmp.ne.s32.totalorder %s124, %s126
      %p133 = scmp.eq.s32.totalorder %s27, 1
      %p134 = por %p132, %p133
      %p135 = scmp.ne.s32.totalorder %s126, %s127
      %p136 = scmp.eq.s32.totalorder %s27, 0
      %p137 = por %p135, %p136
      %p138 = scmp.ne.s32.totalorder %s126, %s127
      %p139 = scmp.eq.s32.totalorder %s28, 1
      %p140 = por %p138, %p139
      %p142 = scmp.ne.s32.totalorder %s127, %s141
      %p143 = scmp.eq.s32.totalorder %s28, 0
      %p144 = por %p142, %p143
      %s146 = sadd.s32 %s145, 1
      %p149 = scmp.eq.s32.totalorder %s22, 1
      %p150 = scmp.ne.s32.totalorder %s145, %s147
      %p151 = scmp.eq.s32.totalorder %s22, 0
      %p152 = por %p150, %p151
      %p153 = scmp.ne.s32.totalorder %s145, %s147
      %p154 = scmp.eq.s32.totalorder %s27, 1
      %p155 = por %p153, %p154
      %p156 = scmp.ne.s32.totalorder %s147, %s148
      %p157 = scmp.eq.s32.totalorder %s27, 0
      %p158 = por %p156, %p157
      %p159 = scmp.ne.s32.totalorder %s147, %s148
      %p160 = scmp.eq.s32.totalorder %s28, 1
      %p161 = por %p159, %p160
      %p163 = scmp.ne.s32.totalorder %s148, %s162
      %p164 = scmp.eq.s32.totalorder %s28, 0
      %p165 = por %p163, %p164
      %s167 = sadd.s32 %s166, 1
      %p170 = scmp.eq.s32.totalorder %s22, 1
      %p171 = scmp.ne.s32.totalorder %s166, %s168
      %p172 = scmp.eq.s32.totalorder %s22, 0
      %p173 = por %p171, %p172
      %p174 = scmp.ne.s32.totalorder %s166, %s168
      %p175 = scmp.eq.s32.totalorder %s27, 1
      %p176 = por %p174, %p175
      %p177 = scmp.ne.s32.totalorder %s168, %s169
      %p178 = scmp.eq.s32.totalorder %s27, 0
      %p179 = por %p177, %p178
      %p180 = scmp.ne.s32.totalorder %s168, %s169
      %p181 = scmp.eq.s32.totalorder %s28, 1
      %p182 = por %p180, %p181
      %p184 = scmp.ne.s32.totalorder %s169, %s183
      %p185 = scmp.eq.s32.totalorder %s28, 0
      %p186 = por %p184, %p185
      %s188 = sadd.s32 %s187, 1
      %p191 = scmp.eq.s32.totalorder %s22, 1
      %p192 = scmp.ne.s32.totalorder %s187, %s189
      %p193 = scmp.eq.s32.totalorder %s22, 0
      %p194 = por %p192, %p193
      %p195 = scmp.ne.s32.totalorder %s187, %s189
      %p196 = scmp.eq.s32.totalorder %s27, 1
      %p197 = por %p195, %p196
      %p198 = scmp.ne.s32.totalorder %s189, %s190
      %p199 = scmp.eq.s32.totalorder %s27, 0
      %p200 = por %p198, %p199
      %p201 = scmp.ne.s32.totalorder %s189, %s190
      %p202 = scmp.eq.s32.totalorder %s28, 1
      %p203 = por %p201, %p202
      %p205 = scmp.ne.s32.totalorder %s190, %s204
      %p206 = scmp.eq.s32.totalorder %s28, 0
      %p207 = por %p205, %p206
      %s209 = sadd.s32 %s208, 1
      %p212 = scmp.eq.s32.totalorder %s22, 1
      %p213 = scmp.ne.s32.totalorder %s208, %s210
      %p214 = scmp.eq.s32.totalorder %s22, 0
      %p215 = por %p213, %p214
      %p216 = scmp.ne.s32.totalorder %s208, %s210
      %p217 = scmp.eq.s32.totalorder %s27, 1
      %p218 = por %p216, %p217
      %p219 = scmp.ne.s32.totalorder %s210, %s211
      %p220 = scmp.eq.s32.totalorder %s27, 0
      %p221 = por %p219, %p220
      %p222 = scmp.ne.s32.totalorder %s210, %s211
      %p223 = scmp.eq.s32.totalorder %s28, 1
      %p224 = por %p222, %p223
      %p226 = scmp.ne.s32.totalorder %s211, %s225
      %p227 = scmp.eq.s32.totalorder %s28, 0
      %p228 = por %p226, %p227
      %s229 = ssub.s32 %s29, %s48
      %s230 = ssub.s32 %s30, %s44
      %s231 = sor.u32 %s229, %s230
      %p232 = scmp.eq.s32.totalorder %s231, 0
      %s234 = sadd.s32 %s233, 1
      %s235 = scalar_select %p232, %s233, %s234
      %p238 = pneg %p232
      %p239 = scmp.eq.s32.totalorder %s22, 1
      %p240 = por %p238, %p239
      %p241 = scmp.ne.s32.totalorder %s233, %s236
      %p242 = scmp.eq.s32.totalorder %s22, 0
      %p243 = por %p241, %p242
      %p244 = scmp.ne.s32.totalorder %s233, %s236
      %p245 = scmp.eq.s32.totalorder %s27, 1
      %p246 = por %p244, %p245
      %p247 = scmp.ne.s32.totalorder %s236, %s237
      %p248 = scmp.eq.s32.totalorder %s27, 0
      %p249 = por %p247, %p248
      %p250 = scmp.ne.s32.totalorder %s236, %s237
      %p251 = scmp.eq.s32.totalorder %s28, 1
      %p252 = por %p250, %p251
      %p254 = scmp.ne.s32.totalorder %s237, %s253
      %p255 = scmp.eq.s32.totalorder %s28, 0
      %p256 = por %p254, %p255
      %p257 = scmp.le.s32.totalorder 1, %s22
      %p258 = scmp.lt.s32.totalorder %s22, 3
      %p259 = pnand %p257, %p258
      %p260 = pneg %p259
      // Predicated region
      $region9: #{tpu_custom_call.1} parent=5 // pred_check
        _
      $region10: #{tpu_custom_call.1} parent=5 // pred_check_branch
        %262 = sbr.rel (%p259) target = $region12
      $region11: #{tpu_custom_call.1} parent=5 // pred_region
        %s263 = ssub.s32 %s22, 1
        // Predicated region
        $region13: #{tpu_custom_call.1} parent=11 // pred_check
          %p264 = pneg %p67
        $region14: #{tpu_custom_call.1} parent=11 // pred_check_branch
          %266 = sbr.rel (%p264) target = $region16
        $region15: #{tpu_custom_call.1} parent=11 // pred_region
          %s268 = ssub.s32 128, 128
          %269 = vsyncadd [#allocation3], %s268
          %s270 = smul.addr %s33, 128
          %s271 = scalar_lea.hbm %s0, %s270
          %s273 = sshll.u32 [#allocation2], 4
          %s274 = int_to_ptr.vmem [resolvable:$true] %s273
          %276 = dma.hbm_to_vmem [thread:$0]  %s271, 128, %s274, [#allocation3]
        $region16: #{tpu_custom_call.1} parent=11 // pred_fallthru
          _
        // Predicated region
        $region17: #{tpu_custom_call.1} parent=11 // pred_check
          %p277 = pneg %p116
        $region18: #{tpu_custom_call.1} parent=11 // pred_check_branch
          %279 = sbr.rel (%p277) target = $region20
        $region19: #{tpu_custom_call.1} parent=11 // pred_region
          %s281 = ssub.s32 512, 512
          %282 = vsyncadd [#allocation6], %s281
          %s283 = sshll.u32 [#allocation7], 4
          %s284 = int_to_ptr.vmem [resolvable:$true] %s283
          %289 = dma.hbm_to_vmem [thread:$0]  %s2, 512, %s284, [#allocation6], 128, 128, 8
        $region20: #{tpu_custom_call.1} parent=11 // pred_fallthru
          _
        // Predicated region
        $region21: #{tpu_custom_call.1} parent=11 // pred_check
          %p290 = pneg %p137
        $region22: #{tpu_custom_call.1} parent=11 // pred_check_branch
          %292 = sbr.rel (%p290) target = $region24
        $region23: #{tpu_custom_call.1} parent=11 // pred_region
          _
        $region24: #{tpu_custom_call.1} parent=11 // pred_fallthru
          _
        // Predicated region
        $region25: #{tpu_custom_call.1} parent=11 // pred_check
          %p293 = pneg %p158
        $region26: #{tpu_custom_call.1} parent=11 // pred_check_branch
          %295 = sbr.rel (%p293) target = $region28
        $region27: #{tpu_custom_call.1} parent=11 // pred_region
          %s297 = ssub.s32 512, 512
          %298 = vsyncadd [#allocation9], %s297
          %s299 = sshll.u32 [#allocation8], 4
          %s300 = int_to_ptr.vmem [resolvable:$true] %s299
          %305 = dma.hbm_to_vmem [thread:$0]  %s4, 512, %s300, [#allocation9], 128, 128, 8
        $region28: #{tpu_custom_call.1} parent=11 // pred_fallthru
          _
        // Predicated region
        $region29: #{tpu_custom_call.1} parent=11 // pred_check
          %p306 = pneg %p179
        $region30: #{tpu_custom_call.1} parent=11 // pred_check_branch
          %308 = sbr.rel (%p306) target = $region32
        $region31: #{tpu_custom_call.1} parent=11 // pred_region
          _
        $region32: #{tpu_custom_call.1} parent=11 // pred_fallthru
          _
        // Predicated region
        $region33: #{tpu_custom_call.1} parent=11 // pred_check
          %p309 = pneg %p200
        $region34: #{tpu_custom_call.1} parent=11 // pred_check_branch
          %311 = sbr.rel (%p309) target = $region36
        $region35: #{tpu_custom_call.1} parent=11 // pred_region
          %s313 = ssub.s32 512, 512
          %314 = vsyncadd [#allocation9], %s313
          %s315 = sshll.u32 [#allocation10], 4
          %s316 = int_to_ptr.vmem [resolvable:$true] %s315
          %321 = dma.hbm_to_vmem [thread:$0]  %s6, 512, %s316, [#allocation9], 128, 128, 8
        $region36: #{tpu_custom_call.1} parent=11 // pred_fallthru
          _
        // Predicated region
        $region37: #{tpu_custom_call.1} parent=11 // pred_check
          %p322 = pneg %p221
        $region38: #{tpu_custom_call.1} parent=11 // pred_check_branch
          %324 = sbr.rel (%p322) target = $region40
        $region39: #{tpu_custom_call.1} parent=11 // pred_region
          _
        $region40: #{tpu_custom_call.1} parent=11 // pred_fallthru
          _
      $region12: #{tpu_custom_call.1} parent=5 // pred_fallthru
        _
      %p325 = scmp.lt.s32.totalorder %s22, 2
      // Predicated region
      $region41: #{tpu_custom_call.1} parent=5 // pred_check
        %p326 = pneg %p325
      $region42: #{tpu_custom_call.1} parent=5 // pred_check_branch
        %328 = sbr.rel (%p326) target = $region44
      $region43: #{tpu_custom_call.1} parent=5 // pred_region
        // Predicated region
        $region45: #{tpu_custom_call.1} parent=43 // pred_check
          %p329 = pneg %p89
        $region46: #{tpu_custom_call.1} parent=43 // pred_check_branch
          %331 = sbr.rel (%p329) target = $region48
        $region47: #{tpu_custom_call.1} parent=43 // pred_region
          %s332 = sand.u32 %s22, 1
          %s333 = scalar_lea.sflag [#allocation6], %s332
          %s334 = sand.u32 %s79, 1
          %s335 = smul.addr %s334, 16
          %s336 = scalar_lea.vmem [#allocation5], %s335
          %s337 = smul.u32 2, %s31
          %s339 = ssub.s32 256, 256
          %340 = vsyncadd %s333, %s339
          %s341 = smul.addr %s29, 2
          %s342 = sadd.s32 %s337, %s341
          %s343 = smul.addr %s342, 128
          %s344 = scalar_lea.hbm %s1, %s343
          %s345 = sshll.u32 %s336, 4
          %s346 = int_to_ptr.vmem [resolvable:$true] %s345
          %351 = dma.hbm_to_vmem [thread:$0]  %s344, 256, %s346, %s333, 128, 128, 8
        $region48: #{tpu_custom_call.1} parent=43 // pred_fallthru
          _
      $region44: #{tpu_custom_call.1} parent=5 // pred_fallthru
        _
      %p352 = scmp.le.s32.totalorder 1, %s22
      %p353 = scmp.lt.s32.totalorder %s22, 3
      %p354 = pnand %p352, %p353
      %p355 = pneg %p354
      // Predicated region
      $region49: #{tpu_custom_call.1} parent=5 // pred_check
        _
      $region50: #{tpu_custom_call.1} parent=5 // pred_check_branch
        %357 = sbr.rel (%p354) target = $region52
      $region51: #{tpu_custom_call.1} parent=5 // pred_region
        %s358 = ssub.s32 %s22, 1
        // Predicated region
        $region53: #{tpu_custom_call.1} parent=51 // pred_check
          %p359 = pneg %p67
        $region54: #{tpu_custom_call.1} parent=51 // pred_check_branch
          %361 = sbr.rel (%p359) target = $region56
        $region55: #{tpu_custom_call.1} parent=51 // pred_region
          %362 = dma.done [#allocation3], 128
        $region56: #{tpu_custom_call.1} parent=51 // pred_fallthru
          _
        %s363 = sand.u32 %s27, 1
        %s364 = scalar_lea.sflag [#allocation6], %s363
        %s365 = sand.u32 %s82, 1
        %s366 = smul.addr %s365, 16
        %s367 = scalar_lea.vmem [#allocation5], %s366
        // Predicated region
        $region57: #{tpu_custom_call.1} parent=51 // pred_check
          %p368 = pneg %p95
        $region58: #{tpu_custom_call.1} parent=51 // pred_check_branch
          %370 = sbr.rel (%p368) target = $region60
        $region59: #{tpu_custom_call.1} parent=51 // pred_region
          %371 = dma.done %s364, 256
        $region60: #{tpu_custom_call.1} parent=51 // pred_fallthru
          _
        // Predicated region
        $region61: #{tpu_custom_call.1} parent=51 // pred_check
          %p372 = pneg %p116
        $region62: #{tpu_custom_call.1} parent=51 // pred_check_branch
          %374 = sbr.rel (%p372) target = $region64
        $region63: #{tpu_custom_call.1} parent=51 // pred_region
          %375 = dma.done [#allocation6], 512
        $region64: #{tpu_custom_call.1} parent=51 // pred_fallthru
          _
        // Predicated region
        $region65: #{tpu_custom_call.1} parent=51 // pred_check
          %p376 = pneg %p158
        $region66: #{tpu_custom_call.1} parent=51 // pred_check_branch
          %378 = sbr.rel (%p376) target = $region68
        $region67: #{tpu_custom_call.1} parent=51 // pred_region
          %379 = dma.done [#allocation9], 512
        $region68: #{tpu_custom_call.1} parent=51 // pred_fallthru
          _
        // Predicated region
        $region69: #{tpu_custom_call.1} parent=51 // pred_check
          %p380 = pneg %p200
        $region70: #{tpu_custom_call.1} parent=51 // pred_check_branch
          %382 = sbr.rel (%p380) target = $region72
        $region71: #{tpu_custom_call.1} parent=51 // pred_region
          %383 = dma.done [#allocation9], 512
        $region72: #{tpu_custom_call.1} parent=51 // pred_fallthru
          _
        %p384 = pneg %p67
        %p385 = pneg %p64
        %s386 = sand.u32 %s27, 1
        %s387 = scalar_lea.sflag [#allocation6], %s386
        %s388 = sand.u32 %s82, 1
        %s389 = smul.addr %s388, 16
        %s390 = scalar_lea.vmem [#allocation5], %s389
        %p391 = pneg %p95
        %p392 = pneg %p92
        %p393 = pneg %p116
        %p394 = pneg %p113
        %p395 = pneg %p137
        %p396 = pneg %p134
        %p397 = pneg %p158
        %p398 = pneg %p155
        %p399 = pneg %p179
        %p400 = pneg %p176
        %p401 = pneg %p200
        %p402 = pneg %p197
        %p403 = pneg %p221
        %p404 = pneg %p218
        %p405 = pneg %p249
        %p406 = pneg %p246
        %s407 = sand.u32 %s236, 1
        %s408 = scalar_lea.sflag [#allocation4], %s407
        %s409 = sand.u32 %s236, 1
        %s410 = smul.addr %s409, 8
        %s411 = scalar_lea.vmem [#allocation11], %s410
        %s412 = smul.u32 2, %s34
        %v413 = vld [vmem:[#allocation2] sm:$0xff]
        %v414 = vld [vmem:[#allocation7] sm:$0xff]
        %v415 = vld [vmem:[#allocation7 + $0x8] sm:$0xff]
        %v416 = vld [vmem:[#allocation7 + $0x10] sm:$0xff]
        %v417 = vld [vmem:[#allocation7 + $0x18] sm:$0xff]
        %v418 = vld [vmem:[%s3] sm:$0x1]
        %v420 = vlaneseq
        %v421 = vshrl.u32 %v420, 7
        %v422 = vsub.s32 0, %v421
        %v423 = vrot.slane %v418, %v422
        %vm425 = vcmask 261120
        %v427 = vsel %vm425, %v413, 0
        %429 = vmatprep.subr.mxu0 0.0
        %430 = vmatpush1.msra.mxu0 %v414
        %431 = vmatprep.subr.mxu0 0.0
        %432 = vmatpush1.msra.mxu0 %v415
        %433 = vmatprep.subr.mxu0 0.0
        %434 = vmatpush1.msra.mxu0 %v416
        %435 = vmatprep.subr.mxu0 0.0
        %436 = vmatpush1.msra.mxu0 %v417
        %437 = vmatprep.subr.mxu0 0.0
        %438 = vmatpush1.msra.mxu0 0.0
        %439 = vmatprep.subr.mxu0 0.0
        %440 = vmatpush1.msra.mxu0 0.0
        %441 = vmatprep.subr.mxu0 0.0
        %442 = vmatpush1.msra.mxu0 0.0
        %443 = vmatprep.subr.mxu0 0.0
        %444 = vmatpush1.msra.mxu0 0.0
        %445 = vmatprep.subr.mxu0 0.0
        %446 = vmatpush1.msra.mxu0 0.0
        %447 = vmatprep.subr.mxu0 0.0
        %448 = vmatpush1.msra.mxu0 0.0
        %449 = vmatprep.subr.mxu0 0.0
        %450 = vmatpush1.msra.mxu0 0.0
        %451 = vmatprep.subr.mxu0 0.0
        %452 = vmatpush1.msra.mxu0 0.0
        %453 = vmatprep.subr.mxu0 0.0
        %454 = vmatpush1.msra.mxu0 0.0
        %455 = vmatprep.subr.mxu0 0.0
        %456 = vmatpush1.msra.mxu0 0.0
        %457 = vmatprep.subr.mxu0 0.0
        %458 = vmatpush1.msra.mxu0 0.0
        %459 = vmatprep.subr.mxu0 0.0
        %460 = vmatpush1.msra.mxu0 0.0
        %461 = vmatprep.subr.mxu0 0.0
        %462 = vmatpush1.msra.mxu0 0.0
        %463 = vmatprep.subr.mxu0 0.0
        %464 = vmatpush1.msra.mxu0 0.0
        %465 = vmatprep.subr.mxu0 0.0
        %466 = vmatpush1.msra.mxu0 0.0
        %467 = vmatprep.subr.mxu0 0.0
        %468 = vmatpush1.msra.mxu0 0.0
        %469 = vmatprep.subr.mxu0 0.0
        %470 = vmatpush1.msra.mxu0 0.0
        %471 = vmatprep.subr.mxu0 0.0
        %472 = vmatpush1.msra.mxu0 0.0
        %473 = vmatprep.subr.mxu0 0.0
        %474 = vmatpush1.msra.mxu0 0.0
        %475 = vmatprep.subr.mxu0 0.0
        %476 = vmatpush1.msra.mxu0 0.0
        %477 = vmatprep.subr.mxu0 0.0
        %478 = vmatpush1.msra.mxu0 0.0
        %479 = vmatprep.subr.mxu0 0.0
        %480 = vmatpush1.msra.mxu0 0.0
        %481 = vmatprep.subr.mxu0 0.0
        %482 = vmatpush1.msra.mxu0 0.0
        %483 = vmatprep.subr.mxu0 0.0
        %484 = vmatpush1.msra.mxu0 0.0
        %485 = vmatprep.subr.mxu0 0.0
        %486 = vmatpush1.msra.mxu0 0.0
        %487 = vmatprep.subr.mxu0 0.0
        %488 = vmatpush1.msra.mxu0 0.0
        %489 = vmatprep.subr.mxu0 0.0
        %490 = vmatpush1.msra.mxu0 0.0
        %491 = vmatprep.subr.mxu0 0.0
        %492 = vmatpush1.msra.mxu0 0.0
        %493 = vmatprep.mubr.f32.mxu0 0.0
        %494 = vmatmul.mubr.f32.gmra.mrb[0].mxu0 %v427
        %v495 = vpop.f32.mrb[0].mxu0
        %v496 = vadd.f32 %v423, %v495
        %v497 = vpop.f32.mrb[0].mxu0
        %498 = vdwg.mxu0
        %v499 = vld [vmem:[%s367] sm:$0xff]
        %v500 = vld [vmem:[%s367 + $0x8] sm:$0xff]
        %v501 = vld [vmem:[#allocation8] sm:$0xff]
        %v502 = vld [vmem:[#allocation8 + $0x8] sm:$0xff]
        %v503 = vld [vmem:[#allocation8 + $0x10] sm:$0xff]
        %v504 = vld [vmem:[#allocation8 + $0x18] sm:$0xff]
        %v505 = vld [vmem:[%s5] sm:$0x1]
        %v507 = vlaneseq
        %v508 = vshrl.u32 %v507, 7
        %v509 = vsub.s32 0, %v508
        %v510 = vrot.slane %v505, %v509
        %v513 = vsel %vm425, %v499, 0
        %v516 = vsel %vm425, %v500, 0
        %518 = vmatprep.subr.mxu0 0.0
        %519 = vmatpush1.msra.mxu0 %v501
        %520 = vmatprep.subr.mxu0 0.0
        %521 = vmatpush1.msra.mxu0 %v502
        %522 = vmatprep.subr.mxu0 0.0
        %523 = vmatpush1.msra.mxu0 %v503
        %524 = vmatprep.subr.mxu0 0.0
        %525 = vmatpush1.msra.mxu0 %v504
        %526 = vmatprep.subr.mxu0 0.0
        %527 = vmatpush1.msra.mxu0 0.0
        %528 = vmatprep.subr.mxu0 0.0
        %529 = vmatpush1.msra.mxu0 0.0
        %530 = vmatprep.subr.mxu0 0.0
        %531 = vmatpush1.msra.mxu0 0.0
        %532 = vmatprep.subr.mxu0 0.0
        %533 = vmatpush1.msra.mxu0 0.0
        %534 = vmatprep.subr.mxu0 0.0
        %535 = vmatpush1.msra.mxu0 0.0
        %536 = vmatprep.subr.mxu0 0.0
        %537 = vmatpush1.msra.mxu0 0.0
        %538 = vmatprep.subr.mxu0 0.0
        %539 = vmatpush1.msra.mxu0 0.0
        %540 = vmatprep.subr.mxu0 0.0
        %541 = vmatpush1.msra.mxu0 0.0
        %542 = vmatprep.subr.mxu0 0.0
        %543 = vmatpush1.msra.mxu0 0.0
        %544 = vmatprep.subr.mxu0 0.0
        %545 = vmatpush1.msra.mxu0 0.0
        %546 = vmatprep.subr.mxu0 0.0
        %547 = vmatpush1.msra.mxu0 0.0
        %548 = vmatprep.subr.mxu0 0.0
        %549 = vmatpush1.msra.mxu0 0.0
        %550 = vmatprep.subr.mxu0 0.0
        %551 = vmatpush1.msra.mxu0 0.0
        %552 = vmatprep.subr.mxu0 0.0
        %553 = vmatpush1.msra.mxu0 0.0
        %554 = vmatprep.subr.mxu0 0.0
        %555 = vmatpush1.msra.mxu0 0.0
        %556 = vmatprep.subr.mxu0 0.0
        %557 = vmatpush1.msra.mxu0 0.0
        %558 = vmatprep.subr.mxu0 0.0
        %559 = vmatpush1.msra.mxu0 0.0
        %560 = vmatprep.subr.mxu0 0.0
        %561 = vmatpush1.msra.mxu0 0.0
        %562 = vmatprep.subr.mxu0 0.0
        %563 = vmatpush1.msra.mxu0 0.0
        %564 = vmatprep.subr.mxu0 0.0
        %565 = vmatpush1.msra.mxu0 0.0
        %566 = vmatprep.subr.mxu0 0.0
        %567 = vmatpush1.msra.mxu0 0.0
        %568 = vmatprep.subr.mxu0 0.0
        %569 = vmatpush1.msra.mxu0 0.0
        %570 = vmatprep.subr.mxu0 0.0
        %571 = vmatpush1.msra.mxu0 0.0
        %572 = vmatprep.subr.mxu0 0.0
        %573 = vmatpush1.msra.mxu0 0.0
        %574 = vmatprep.subr.mxu0 0.0
        %575 = vmatpush1.msra.mxu0 0.0
        %576 = vmatprep.subr.mxu0 0.0
        %577 = vmatpush1.msra.mxu0 0.0
        %578 = vmatprep.subr.mxu0 0.0
        %579 = vmatpush1.msra.mxu0 0.0
        %580 = vmatprep.subr.mxu0 0.0
        %581 = vmatpush1.msra.mxu0 0.0
        %582 = vmatprep.mubr.f32.mxu0 0.0
        %583 = vmatmul.mubr.f32.gmra.mrb[0].mxu0 %v513
        %v584 = vpop.f32.mrb[0].mxu0
        %v585 = vadd.f32 %v510, %v584
        %v586 = vpop.f32.mrb[0].mxu0
        %587 = vmatprep.mubr.f32.mxu0 0.0
        %588 = vmatmul.mubr.f32.gmra.mrb[0].mxu0 %v516
        %v589 = vpop.f32.mrb[0].mxu0
        %v590 = vadd.f32 %v510, %v589
        %v591 = vpop.f32.mrb[0].mxu0
        %592 = vdwg.mxu0
        %v593 = vmul.f32 %v496, 0.17677669
        %vm594 = vcmask 64512
        %v596 = vsel %vm594, %v593, 0
        %v599 = vsel %vm594, %v585, 0
        %v602 = vsel %vm594, %v590, 0
        %604 = vmatprep.subr.mxu0 0.0
        %605 = vmatpush1.xpose.msra.mxu0 %v599
        %606 = vmatprep.subr.mxu0 0.0
        %607 = vmatpush1.xpose.msra.mxu0 %v602
        %608 = vmatprep.subr.mxu0 0.0
        %609 = vmatpush1.xpose.msra.mxu0 0.0
        %610 = vmatprep.subr.mxu0 0.0
        %611 = vmatpush1.xpose.msra.mxu0 0.0
        %612 = vmatprep.subr.mxu0 0.0
        %613 = vmatpush1.xpose.msra.mxu0 0.0
        %614 = vmatprep.subr.mxu0 0.0
        %615 = vmatpush1.xpose.msra.mxu0 0.0
        %616 = vmatprep.subr.mxu0 0.0
        %617 = vmatpush1.xpose.msra.mxu0 0.0
        %618 = vmatprep.subr.mxu0 0.0
        %619 = vmatpush1.xpose.msra.mxu0 0.0
        %620 = vmatprep.subr.mxu0 0.0
        %621 = vmatpush1.xpose.msra.mxu0 0.0
        %622 = vmatprep.subr.mxu0 0.0
        %623 = vmatpush1.xpose.msra.mxu0 0.0
        %624 = vmatprep.subr.mxu0 0.0
        %625 = vmatpush1.xpose.msra.mxu0 0.0
        %626 = vmatprep.subr.mxu0 0.0
        %627 = vmatpush1.xpose.msra.mxu0 0.0
        %628 = vmatprep.subr.mxu0 0.0
        %629 = vmatpush1.xpose.msra.mxu0 0.0
        %630 = vmatprep.subr.mxu0 0.0
        %631 = vmatpush1.xpose.msra.mxu0 0.0
        %632 = vmatprep.subr.mxu0 0.0
        %633 = vmatpush1.xpose.msra.mxu0 0.0
        %634 = vmatprep.subr.mxu0 0.0
        %635 = vmatpush1.xpose.msra.mxu0 0.0
        %636 = vmatprep.subr.mxu0 0.0
        %637 = vmatpush1.xpose.msra.mxu0 0.0
        %638 = vmatprep.subr.mxu0 0.0
        %639 = vmatpush1.xpose.msra.mxu0 0.0
        %640 = vmatprep.subr.mxu0 0.0
        %641 = vmatpush1.xpose.msra.mxu0 0.0
        %642 = vmatprep.subr.mxu0 0.0
        %643 = vmatpush1.xpose.msra.mxu0 0.0
        %644 = vmatprep.subr.mxu0 0.0
        %645 = vmatpush1.xpose.msra.mxu0 0.0
        %646 = vmatprep.subr.mxu0 0.0
        %647 = vmatpush1.xpose.msra.mxu0 0.0
        %648 = vmatprep.subr.mxu0 0.0
        %649 = vmatpush1.xpose.msra.mxu0 0.0
        %650 = vmatprep.subr.mxu0 0.0
        %651 = vmatpush1.xpose.msra.mxu0 0.0
        %652 = vmatprep.subr.mxu0 0.0
        %653 = vmatpush1.xpose.msra.mxu0 0.0
        %654 = vmatprep.subr.mxu0 0.0
        %655 = vmatpush1.xpose.msra.mxu0 0.0
        %656 = vmatprep.subr.mxu0 0.0
        %657 = vmatpush1.xpose.msra.mxu0 0.0
        %658 = vmatprep.subr.mxu0 0.0
        %659 = vmatpush1.xpose.msra.mxu0 0.0
        %660 = vmatprep.subr.mxu0 0.0
        %661 = vmatpush1.xpose.msra.mxu0 0.0
        %662 = vmatprep.subr.mxu0 0.0
        %663 = vmatpush1.xpose.msra.mxu0 0.0
        %664 = vmatprep.subr.mxu0 0.0
        %665 = vmatpush1.xpose.msra.mxu0 0.0
        %666 = vmatprep.subr.mxu0 0.0
        %667 = vmatpush1.xpose.msra.mxu0 0.0
        %668 = vmatprep.mubr.f32.mxu0 0.0
        %669 = vmatmul.mubr.f32.gmra.mrb[0].mxu0 %v596
        %v670 = vpop.f32.mrb[0].mxu0
        %v671 = vadd.f32 0.0, %v670
        %v672 = vpop.f32.mrb[0].mxu0
        %673 = vdwg.mxu0
        %vm674 = vcmask 130048
        %v675 = vsel %vm674, %v671, -inf
        %676 = vmax.xlane.f32.xlu0 %v675
        %v677 = vpop.xlane.xlu0 %676
        %v678 = vsub.f32 %v671, %v677
        %v679 = vmul.f32 %v678, 1.442695
        %v680 = vpow.pop %v679
        %681 = vrot.lane.b32.xlu0 %v585, 96
        %v682 = vpop.permute.xlu0 %681
        %683 = vrot.lane.b32.xlu0 %v590, 96
        %v684 = vpop.permute.xlu0 %683
        %v688 = vsel %vm674, %v680, 0
        %690 = vmatprep.subr.mxu0 0.0
        %691 = vmatpush1.msra.mxu0 %v682
        %692 = vmatprep.subr.mxu0 0.0
        %693 = vmatpush1.msra.mxu0 %v684
        %694 = vmatprep.subr.mxu0 0.0
        %695 = vmatpush1.msra.mxu0 0.0
        %696 = vmatprep.subr.mxu0 0.0
        %697 = vmatpush1.msra.mxu0 0.0
        %698 = vmatprep.subr.mxu0 0.0
        %699 = vmatpush1.msra.mxu0 0.0
        %700 = vmatprep.subr.mxu0 0.0
        %701 = vmatpush1.msra.mxu0 0.0
        %702 = vmatprep.subr.mxu0 0.0
        %703 = vmatpush1.msra.mxu0 0.0
        %704 = vmatprep.subr.mxu0 0.0
        %705 = vmatpush1.msra.mxu0 0.0
        %706 = vmatprep.subr.mxu0 0.0
        %707 = vmatpush1.msra.mxu0 0.0
        %708 = vmatprep.subr.mxu0 0.0
        %709 = vmatpush1.msra.mxu0 0.0
        %710 = vmatprep.subr.mxu0 0.0
        %711 = vmatpush1.msra.mxu0 0.0
        %712 = vmatprep.subr.mxu0 0.0
        %713 = vmatpush1.msra.mxu0 0.0
        %714 = vmatprep.subr.mxu0 0.0
        %715 = vmatpush1.msra.mxu0 0.0
        %716 = vmatprep.subr.mxu0 0.0
        %717 = vmatpush1.msra.mxu0 0.0
        %718 = vmatprep.subr.mxu0 0.0
        %719 = vmatpush1.msra.mxu0 0.0
        %720 = vmatprep.subr.mxu0 0.0
        %721 = vmatpush1.msra.mxu0 0.0
        %722 = vmatprep.subr.mxu0 0.0
        %723 = vmatpush1.msra.mxu0 0.0
        %724 = vmatprep.subr.mxu0 0.0
        %725 = vmatpush1.msra.mxu0 0.0
        %726 = vmatprep.subr.mxu0 0.0
        %727 = vmatpush1.msra.mxu0 0.0
        %728 = vmatprep.subr.mxu0 0.0
        %729 = vmatpush1.msra.mxu0 0.0
        %730 = vmatprep.subr.mxu0 0.0
        %731 = vmatpush1.msra.mxu0 0.0
        %732 = vmatprep.subr.mxu0 0.0
        %733 = vmatpush1.msra.mxu0 0.0
        %734 = vmatprep.subr.mxu0 0.0
        %735 = vmatpush1.msra.mxu0 0.0
        %736 = vmatprep.subr.mxu0 0.0
        %737 = vmatpush1.msra.mxu0 0.0
        %738 = vmatprep.subr.mxu0 0.0
        %739 = vmatpush1.msra.mxu0 0.0
        %740 = vmatprep.subr.mxu0 0.0
        %741 = vmatpush1.msra.mxu0 0.0
        %742 = vmatprep.subr.mxu0 0.0
        %743 = vmatpush1.msra.mxu0 0.0
        %744 = vmatprep.subr.mxu0 0.0
        %745 = vmatpush1.msra.mxu0 0.0
        %746 = vmatprep.subr.mxu0 0.0
        %747 = vmatpush1.msra.mxu0 0.0
        %748 = vmatprep.subr.mxu0 0.0
        %749 = vmatpush1.msra.mxu0 0.0
        %750 = vmatprep.subr.mxu0 0.0
        %751 = vmatpush1.msra.mxu0 0.0
        %752 = vmatprep.subr.mxu0 0.0
        %753 = vmatpush1.msra.mxu0 0.0
        %754 = vmatprep.mubr.f32.mxu0 0.0
        %755 = vmatmul.mubr.f32.gmra.mrb[0].mxu0 %v688
        %v756 = vpop.f32.mrb[0].mxu0
        %v757 = vadd.f32 0.0, %v756
        %v758 = vpop.f32.mrb[0].mxu0
        %759 = vdwg.mxu0
        %v760 = vsel %vm674, %v680, 0.0
        %761 = vadd.xlane.f32.xlu0 %v760
        %v762 = vpop.xlane.xlu0 %761
        %v763 = vrcp.pop %v762
        %v764 = vmul.f32 %v757, %v763
        %765 = vrot.lane.b32.xlu0 %v593, 120
        %v766 = vpop.permute.xlu0 %765
        %767 = vrot.lane.b32.xlu0 %v585, 120
        %v768 = vpop.permute.xlu0 %767
        %769 = vrot.lane.b32.xlu0 %v590, 120
        %v770 = vpop.permute.xlu0 %769
        %v771 = vsel %vm594, %v766, 0
        %v773 = vsel %vm594, %v768, 0
        %v775 = vsel %vm594, %v770, 0
        %777 = vmatprep.subr.mxu0 0.0
        %778 = vmatpush1.xpose.msra.mxu0 %v773
        %779 = vmatprep.subr.mxu0 0.0
        %780 = vmatpush1.xpose.msra.mxu0 %v775
        %781 = vmatprep.subr.mxu0 0.0
        %782 = vmatpush1.xpose.msra.mxu0 0.0
        %783 = vmatprep.subr.mxu0 0.0
        %784 = vmatpush1.xpose.msra.mxu0 0.0
        %785 = vmatprep.subr.mxu0 0.0
        %786 = vmatpush1.xpose.msra.mxu0 0.0
        %787 = vmatprep.subr.mxu0 0.0
        %788 = vmatpush1.xpose.msra.mxu0 0.0
        %789 = vmatprep.subr.mxu0 0.0
        %790 = vmatpush1.xpose.msra.mxu0 0.0
        %791 = vmatprep.subr.mxu0 0.0
        %792 = vmatpush1.xpose.msra.mxu0 0.0
        %793 = vmatprep.subr.mxu0 0.0
        %794 = vmatpush1.xpose.msra.mxu0 0.0
        %795 = vmatprep.subr.mxu0 0.0
        %796 = vmatpush1.xpose.msra.mxu0 0.0
        %797 = vmatprep.subr.mxu0 0.0
        %798 = vmatpush1.xpose.msra.mxu0 0.0
        %799 = vmatprep.subr.mxu0 0.0
        %800 = vmatpush1.xpose.msra.mxu0 0.0
        %801 = vmatprep.subr.mxu0 0.0
        %802 = vmatpush1.xpose.msra.mxu0 0.0
        %803 = vmatprep.subr.mxu0 0.0
        %804 = vmatpush1.xpose.msra.mxu0 0.0
        %805 = vmatprep.subr.mxu0 0.0
        %806 = vmatpush1.xpose.msra.mxu0 0.0
        %807 = vmatprep.subr.mxu0 0.0
        %808 = vmatpush1.xpose.msra.mxu0 0.0
        %809 = vmatprep.subr.mxu0 0.0
        %810 = vmatpush1.xpose.msra.mxu0 0.0
        %811 = vmatprep.subr.mxu0 0.0
        %812 = vmatpush1.xpose.msra.mxu0 0.0
        %813 = vmatprep.subr.mxu0 0.0
        %814 = vmatpush1.xpose.msra.mxu0 0.0
        %815 = vmatprep.subr.mxu0 0.0
        %816 = vmatpush1.xpose.msra.mxu0 0.0
        %817 = vmatprep.subr.mxu0 0.0
        %818 = vmatpush1.xpose.msra.mxu0 0.0
        %819 = vmatprep.subr.mxu0 0.0
        %820 = vmatpush1.xpose.msra.mxu0 0.0
        %821 = vmatprep.subr.mxu0 0.0
        %822 = vmatpush1.xpose.msra.mxu0 0.0
        %823 = vmatprep.subr.mxu0 0.0
        %824 = vmatpush1.xpose.msra.mxu0 0.0
        %825 = vmatprep.subr.mxu0 0.0
        %826 = vmatpush1.xpose.msra.mxu0 0.0
        %827 = vmatprep.subr.mxu0 0.0
        %828 = vmatpush1.xpose.msra.mxu0 0.0
        %829 = vmatprep.subr.mxu0 0.0
        %830 = vmatpush1.xpose.msra.mxu0 0.0
        %831 = vmatprep.subr.mxu0 0.0
        %832 = vmatpush1.xpose.msra.mxu0 0.0
        %833 = vmatprep.subr.mxu0 0.0
        %834 = vmatpush1.xpose.msra.mxu0 0.0
        %835 = vmatprep.subr.mxu0 0.0
        %836 = vmatpush1.xpose.msra.mxu0 0.0
        %837 = vmatprep.subr.mxu0 0.0
        %838 = vmatpush1.xpose.msra.mxu0 0.0
        %839 = vmatprep.subr.mxu0 0.0
        %840 = vmatpush1.xpose.msra.mxu0 0.0
        %841 = vmatprep.mubr.f32.mxu0 0.0
        %842 = vmatmul.mubr.f32.gmra.mrb[0].mxu0 %v771
        %v843 = vpop.f32.mrb[0].mxu0
        %v844 = vadd.f32 0.0, %v843
        %v845 = vpop.f32.mrb[0].mxu0
        %846 = vdwg.mxu0
        %v847 = vsel %vm674, %v844, -inf
        %848 = vmax.xlane.f32.xlu0 %v847
        %v849 = vpop.xlane.xlu0 %848
        %v850 = vsub.f32 %v844, %v849
        %v851 = vmul.f32 %v850, 1.442695
        %v852 = vpow.pop %v851
        %853 = vrot.lane.b32.xlu0 %v585, 88
        %v854 = vpop.permute.xlu0 %853
        %855 = vrot.lane.b32.xlu0 %v590, 88
        %v856 = vpop.permute.xlu0 %855
        %v860 = vsel %vm674, %v852, 0
        %862 = vmatprep.subr.mxu0 0.0
        %863 = vmatpush1.msra.mxu0 %v854
        %864 = vmatprep.subr.mxu0 0.0
        %865 = vmatpush1.msra.mxu0 %v856
        %866 = vmatprep.subr.mxu0 0.0
        %867 = vmatpush1.msra.mxu0 0.0
        %868 = vmatprep.subr.mxu0 0.0
        %869 = vmatpush1.msra.mxu0 0.0
        %870 = vmatprep.subr.mxu0 0.0
        %871 = vmatpush1.msra.mxu0 0.0
        %872 = vmatprep.subr.mxu0 0.0
        %873 = vmatpush1.msra.mxu0 0.0
        %874 = vmatprep.subr.mxu0 0.0
        %875 = vmatpush1.msra.mxu0 0.0
        %876 = vmatprep.subr.mxu0 0.0
        %877 = vmatpush1.msra.mxu0 0.0
        %878 = vmatprep.subr.mxu0 0.0
        %879 = vmatpush1.msra.mxu0 0.0
        %880 = vmatprep.subr.mxu0 0.0
        %881 = vmatpush1.msra.mxu0 0.0
        %882 = vmatprep.subr.mxu0 0.0
        %883 = vmatpush1.msra.mxu0 0.0
        %884 = vmatprep.subr.mxu0 0.0
        %885 = vmatpush1.msra.mxu0 0.0
        %886 = vmatprep.subr.mxu0 0.0
        %887 = vmatpush1.msra.mxu0 0.0
        %888 = vmatprep.subr.mxu0 0.0
        %889 = vmatpush1.msra.mxu0 0.0
        %890 = vmatprep.subr.mxu0 0.0
        %891 = vmatpush1.msra.mxu0 0.0
        %892 = vmatprep.subr.mxu0 0.0
        %893 = vmatpush1.msra.mxu0 0.0
        %894 = vmatprep.subr.mxu0 0.0
        %895 = vmatpush1.msra.mxu0 0.0
        %896 = vmatprep.subr.mxu0 0.0
        %897 = vmatpush1.msra.mxu0 0.0
        %898 = vmatprep.subr.mxu0 0.0
        %899 = vmatpush1.msra.mxu0 0.0
        %900 = vmatprep.subr.mxu0 0.0
        %901 = vmatpush1.msra.mxu0 0.0
        %902 = vmatprep.subr.mxu0 0.0
        %903 = vmatpush1.msra.mxu0 0.0
        %904 = vmatprep.subr.mxu0 0.0
        %905 = vmatpush1.msra.mxu0 0.0
        %906 = vmatprep.subr.mxu0 0.0
        %907 = vmatpush1.msra.mxu0 0.0
        %908 = vmatprep.subr.mxu0 0.0
        %909 = vmatpush1.msra.mxu0 0.0
        %910 = vmatprep.subr.mxu0 0.0
        %911 = vmatpush1.msra.mxu0 0.0
        %912 = vmatprep.subr.mxu0 0.0
        %913 = vmatpush1.msra.mxu0 0.0
        %914 = vmatprep.subr.mxu0 0.0
        %915 = vmatpush1.msra.mxu0 0.0
        %916 = vmatprep.subr.mxu0 0.0
        %917 = vmatpush1.msra.mxu0 0.0
        %918 = vmatprep.subr.mxu0 0.0
        %919 = vmatpush1.msra.mxu0 0.0
        %920 = vmatprep.subr.mxu0 0.0
        %921 = vmatpush1.msra.mxu0 0.0
        %922 = vmatprep.subr.mxu0 0.0
        %923 = vmatpush1.msra.mxu0 0.0
        %924 = vmatprep.subr.mxu0 0.0
        %925 = vmatpush1.msra.mxu0 0.0
        %926 = vmatprep.mubr.f32.mxu0 0.0
        %927 = vmatmul.mubr.f32.gmra.mrb[0].mxu0 %v860
        %v928 = vpop.f32.mrb[0].mxu0
        %v929 = vadd.f32 0.0, %v928
        %v930 = vpop.f32.mrb[0].mxu0
        %931 = vdwg.mxu0
        %v932 = vsel %vm674, %v852, 0.0
        %933 = vadd.xlane.f32.xlu0 %v932
        %v934 = vpop.xlane.xlu0 %933
        %v935 = vrcp.pop %v934
        %v936 = vmul.f32 %v929, %v935
        %937 = vrot.lane.b32.xlu0 %v593, 112
        %v938 = vpop.permute.xlu0 %937
        %939 = vrot.lane.b32.xlu0 %v585, 112
        %v940 = vpop.permute.xlu0 %939
        %941 = vrot.lane.b32.xlu0 %v590, 112
        %v942 = vpop.permute.xlu0 %941
        %v943 = vsel %vm594, %v938, 0
        %v945 = vsel %vm594, %v940, 0
        %v947 = vsel %vm594, %v942, 0
        %949 = vmatprep.subr.mxu0 0.0
        %950 = vmatpush1.xpose.msra.mxu0 %v945
        %951 = vmatprep.subr.mxu0 0.0
        %952 = vmatpush1.xpose.msra.mxu0 %v947
        %953 = vmatprep.subr.mxu0 0.0
        %954 = vmatpush1.xpose.msra.mxu0 0.0
        %955 = vmatprep.subr.mxu0 0.0
        %956 = vmatpush1.xpose.msra.mxu0 0.0
        %957 = vmatprep.subr.mxu0 0.0
        %958 = vmatpush1.xpose.msra.mxu0 0.0
        %959 = vmatprep.subr.mxu0 0.0
        %960 = vmatpush1.xpose.msra.mxu0 0.0
        %961 = vmatprep.subr.mxu0 0.0
        %962 = vmatpush1.xpose.msra.mxu0 0.0
        %963 = vmatprep.subr.mxu0 0.0
        %964 = vmatpush1.xpose.msra.mxu0 0.0
        %965 = vmatprep.subr.mxu0 0.0
        %966 = vmatpush1.xpose.msra.mxu0 0.0
        %967 = vmatprep.subr.mxu0 0.0
        %968 = vmatpush1.xpose.msra.mxu0 0.0
        %969 = vmatprep.subr.mxu0 0.0
        %970 = vmatpush1.xpose.msra.mxu0 0.0
        %971 = vmatprep.subr.mxu0 0.0
        %972 = vmatpush1.xpose.msra.mxu0 0.0
        %973 = vmatprep.subr.mxu0 0.0
        %974 = vmatpush1.xpose.msra.mxu0 0.0
        %975 = vmatprep.subr.mxu0 0.0
        %976 = vmatpush1.xpose.msra.mxu0 0.0
        %977 = vmatprep.subr.mxu0 0.0
        %978 = vmatpush1.xpose.msra.mxu0 0.0
        %979 = vmatprep.subr.mxu0 0.0
        %980 = vmatpush1.xpose.msra.mxu0 0.0
        %981 = vmatprep.subr.mxu0 0.0
        %982 = vmatpush1.xpose.msra.mxu0 0.0
        %983 = vmatprep.subr.mxu0 0.0
        %984 = vmatpush1.xpose.msra.mxu0 0.0
        %985 = vmatprep.subr.mxu0 0.0
        %986 = vmatpush1.xpose.msra.mxu0 0.0
        %987 = vmatprep.subr.mxu0 0.0
        %988 = vmatpush1.xpose.msra.mxu0 0.0
        %989 = vmatprep.subr.mxu0 0.0
        %990 = vmatpush1.xpose.msra.mxu0 0.0
        %991 = vmatprep.subr.mxu0 0.0
        %992 = vmatpush1.xpose.msra.mxu0 0.0
        %993 = vmatprep.subr.mxu0 0.0
        %994 = vmatpush1.xpose.msra.mxu0 0.0
        %995 = vmatprep.subr.mxu0 0.0
        %996 = vmatpush1.xpose.msra.mxu0 0.0
        %997 = vmatprep.subr.mxu0 0.0
        %998 = vmatpush1.xpose.msra.mxu0 0.0
        %999 = vmatprep.subr.mxu0 0.0
        %1000 = vmatpush1.xpose.msra.mxu0 0.0
        %1001 = vmatprep.subr.mxu0 0.0
        %1002 = vmatpush1.xpose.msra.mxu0 0.0
        %1003 = vmatprep.subr.mxu0 0.0
        %1004 = vmatpush1.xpose.msra.mxu0 0.0
        %1005 = vmatprep.subr.mxu0 0.0
        %1006 = vmatpush1.xpose.msra.mxu0 0.0
        %1007 = vmatprep.subr.mxu0 0.0
        %1008 = vmatpush1.xpose.msra.mxu0 0.0
        %1009 = vmatprep.subr.mxu0 0.0
        %1010 = vmatpush1.xpose.msra.mxu0 0.0
        %1011 = vmatprep.subr.mxu0 0.0
        %1012 = vmatpush1.xpose.msra.mxu0 0.0
        %1013 = vmatprep.mubr.f32.mxu0 0.0
        %1014 = vmatmul.mubr.f32.gmra.mrb[0].mxu0 %v943
        %v1015 = vpop.f32.mrb[0].mxu0
        %v1016 = vadd.f32 0.0, %v1015
        %v1017 = vpop.f32.mrb[0].mxu0
        %1018 = vdwg.mxu0
        %v1019 = vsel %vm674, %v1016, -inf
        %1020 = vmax.xlane.f32.xlu0 %v1019
        %v1021 = vpop.xlane.xlu0 %1020
        %v1022 = vsub.f32 %v1016, %v1021
        %v1023 = vmul.f32 %v1022, 1.442695
        %v1024 = vpow.pop %v1023
        %1025 = vrot.lane.b32.xlu0 %v585, 80
        %v1026 = vpop.permute.xlu0 %1025
        %1027 = vrot.lane.b32.xlu0 %v590, 80
        %v1028 = vpop.permute.xlu0 %1027
        %v1032 = vsel %vm674, %v1024, 0
        %1034 = vmatprep.subr.mxu0 0.0
        %1035 = vmatpush1.msra.mxu0 %v1026
        %1036 = vmatprep.subr.mxu0 0.0
        %1037 = vmatpush1.msra.mxu0 %v1028
        %1038 = vmatprep.subr.mxu0 0.0
        %1039 = vmatpush1.msra.mxu0 0.0
        %1040 = vmatprep.subr.mxu0 0.0
        %1041 = vmatpush1.msra.mxu0 0.0
        %1042 = vmatprep.subr.mxu0 0.0
        %1043 = vmatpush1.msra.mxu0 0.0
        %1044 = vmatprep.subr.mxu0 0.0
        %1045 = vmatpush1.msra.mxu0 0.0
        %1046 = vmatprep.subr.mxu0 0.0
        %1047 = vmatpush1.msra.mxu0 0.0
        %1048 = vmatprep.subr.mxu0 0.0
        %1049 = vmatpush1.msra.mxu0 0.0
        %1050 = vmatprep.subr.mxu0 0.0
        %1051 = vmatpush1.msra.mxu0 0.0
        %1052 = vmatprep.subr.mxu0 0.0
        %1053 = vmatpush1.msra.mxu0 0.0
        %1054 = vmatprep.subr.mxu0 0.0
        %1055 = vmatpush1.msra.mxu0 0.0
        %1056 = vmatprep.subr.mxu0 0.0
        %1057 = vmatpush1.msra.mxu0 0.0
        %1058 = vmatprep.subr.mxu0 0.0
        %1059 = vmatpush1.msra.mxu0 0.0
        %1060 = vmatprep.subr.mxu0 0.0
        %1061 = vmatpush1.msra.mxu0 0.0
        %1062 = vmatprep.subr.mxu0 0.0
        %1063 = vmatpush1.msra.mxu0 0.0
        %1064 = vmatprep.subr.mxu0 0.0
        %1065 = vmatpush1.msra.mxu0 0.0
        %1066 = vmatprep.subr.mxu0 0.0
        %1067 = vmatpush1.msra.mxu0 0.0
        %1068 = vmatprep.subr.mxu0 0.0
        %1069 = vmatpush1.msra.mxu0 0.0
        %1070 = vmatprep.subr.mxu0 0.0
        %1071 = vmatpush1.msra.mxu0 0.0
        %1072 = vmatprep.subr.mxu0 0.0
        %1073 = vmatpush1.msra.mxu0 0.0
        %1074 = vmatprep.subr.mxu0 0.0
        %1075 = vmatpush1.msra.mxu0 0.0
        %1076 = vmatprep.subr.mxu0 0.0
        %1077 = vmatpush1.msra.mxu0 0.0
        %1078 = vmatprep.subr.mxu0 0.0
        %1079 = vmatpush1.msra.mxu0 0.0
        %1080 = vmatprep.subr.mxu0 0.0
        %1081 = vmatpush1.msra.mxu0 0.0
        %1082 = vmatprep.subr.mxu0 0.0
        %1083 = vmatpush1.msra.mxu0 0.0
        %1084 = vmatprep.subr.mxu0 0.0
        %1085 = vmatpush1.msra.mxu0 0.0
        %1086 = vmatprep.subr.mxu0 0.0
        %1087 = vmatpush1.msra.mxu0 0.0
        %1088 = vmatprep.subr.mxu0 0.0
        %1089 = vmatpush1.msra.mxu0 0.0
        %1090 = vmatprep.subr.mxu0 0.0
        %1091 = vmatpush1.msra.mxu0 0.0
        %1092 = vmatprep.subr.mxu0 0.0
        %1093 = vmatpush1.msra.mxu0 0.0
        %1094 = vmatprep.subr.mxu0 0.0
        %1095 = vmatpush1.msra.mxu0 0.0
        %1096 = vmatprep.subr.mxu0 0.0
        %1097 = vmatpush1.msra.mxu0 0.0
        %1098 = vmatprep.mubr.f32.mxu0 0.0
        %1099 = vmatmul.mubr.f32.gmra.mrb[0].mxu0 %v1032
        %v1100 = vpop.f32.mrb[0].mxu0
        %v1101 = vadd.f32 0.0, %v1100
        %v1102 = vpop.f32.mrb[0].mxu0
        %1103 = vdwg.mxu0
        %v1104 = vsel %vm674, %v1024, 0.0
        %1105 = vadd.xlane.f32.xlu0 %v1104
        %v1106 = vpop.xlane.xlu0 %1105
        %v1107 = vrcp.pop %v1106
        %v1108 = vmul.f32 %v1101, %v1107
        %1109 = vrot.lane.b32.xlu0 %v593, 104
        %v1110 = vpop.permute.xlu0 %1109
        %1111 = vrot.lane.b32.xlu0 %v585, 104
        %v1112 = vpop.permute.xlu0 %1111
        %1113 = vrot.lane.b32.xlu0 %v590, 104
        %v1114 = vpop.permute.xlu0 %1113
        %v1115 = vsel %vm594, %v1110, 0
        %v1117 = vsel %vm594, %v1112, 0
        %v1119 = vsel %vm594, %v1114, 0
        %1121 = vmatprep.subr.mxu0 0.0
        %1122 = vmatpush1.xpose.msra.mxu0 %v1117
        %1123 = vmatprep.subr.mxu0 0.0
        %1124 = vmatpush1.xpose.msra.mxu0 %v1119
        %1125 = vmatprep.subr.mxu0 0.0
        %1126 = vmatpush1.xpose.msra.mxu0 0.0
        %1127 = vmatprep.subr.mxu0 0.0
        %1128 = vmatpush1.xpose.msra.mxu0 0.0
        %1129 = vmatprep.subr.mxu0 0.0
        %1130 = vmatpush1.xpose.msra.mxu0 0.0
        %1131 = vmatprep.subr.mxu0 0.0
        %1132 = vmatpush1.xpose.msra.mxu0 0.0
        %1133 = vmatprep.subr.mxu0 0.0
        %1134 = vmatpush1.xpose.msra.mxu0 0.0
        %1135 = vmatprep.subr.mxu0 0.0
        %1136 = vmatpush1.xpose.msra.mxu0 0.0
        %1137 = vmatprep.subr.mxu0 0.0
        %1138 = vmatpush1.xpose.msra.mxu0 0.0
        %1139 = vmatprep.subr.mxu0 0.0
        %1140 = vmatpush1.xpose.msra.mxu0 0.0
        %1141 = vmatprep.subr.mxu0 0.0
        %1142 = vmatpush1.xpose.msra.mxu0 0.0
        %1143 = vmatprep.subr.mxu0 0.0
        %1144 = vmatpush1.xpose.msra.mxu0 0.0
        %1145 = vmatprep.subr.mxu0 0.0
        %1146 = vmatpush1.xpose.msra.mxu0 0.0
        %1147 = vmatprep.subr.mxu0 0.0
        %1148 = vmatpush1.xpose.msra.mxu0 0.0
        %1149 = vmatprep.subr.mxu0 0.0
        %1150 = vmatpush1.xpose.msra.mxu0 0.0
        %1151 = vmatprep.subr.mxu0 0.0
        %1152 = vmatpush1.xpose.msra.mxu0 0.0
        %1153 = vmatprep.subr.mxu0 0.0
        %1154 = vmatpush1.xpose.msra.mxu0 0.0
        %1155 = vmatprep.subr.mxu0 0.0
        %1156 = vmatpush1.xpose.msra.mxu0 0.0
        %1157 = vmatprep.subr.mxu0 0.0
        %1158 = vmatpush1.xpose.msra.mxu0 0.0
        %1159 = vmatprep.subr.mxu0 0.0
        %1160 = vmatpush1.xpose.msra.mxu0 0.0
        %1161 = vmatprep.subr.mxu0 0.0
        %1162 = vmatpush1.xpose.msra.mxu0 0.0
        %1163 = vmatprep.subr.mxu0 0.0
        %1164 = vmatpush1.xpose.msra.mxu0 0.0
        %1165 = vmatprep.subr.mxu0 0.0
        %1166 = vmatpush1.xpose.msra.mxu0 0.0
        %1167 = vmatprep.subr.mxu0 0.0
        %1168 = vmatpush1.xpose.msra.mxu0 0.0
        %1169 = vmatprep.subr.mxu0 0.0
        %1170 = vmatpush1.xpose.msra.mxu0 0.0
        %1171 = vmatprep.subr.mxu0 0.0
        %1172 = vmatpush1.xpose.msra.mxu0 0.0
        %1173 = vmatprep.subr.mxu0 0.0
        %1174 = vmatpush1.xpose.msra.mxu0 0.0
        %1175 = vmatprep.subr.mxu0 0.0
        %1176 = vmatpush1.xpose.msra.mxu0 0.0
        %1177 = vmatprep.subr.mxu0 0.0
        %1178 = vmatpush1.xpose.msra.mxu0 0.0
        %1179 = vmatprep.subr.mxu0 0.0
        %1180 = vmatpush1.xpose.msra.mxu0 0.0
        %1181 = vmatprep.subr.mxu0 0.0
        %1182 = vmatpush1.xpose.msra.mxu0 0.0
        %1183 = vmatprep.subr.mxu0 0.0
        %1184 = vmatpush1.xpose.msra.mxu0 0.0
        %1185 = vmatprep.mubr.f32.mxu0 0.0
        %1186 = vmatmul.mubr.f32.gmra.mrb[0].mxu0 %v1115
        %v1187 = vpop.f32.mrb[0].mxu0
        %v1188 = vadd.f32 0.0, %v1187
        %v1189 = vpop.f32.mrb[0].mxu0
        %1190 = vdwg.mxu0
        %v1191 = vsel %vm674, %v1188, -inf
        %1192 = vmax.xlane.f32.xlu0 %v1191
        %v1193 = vpop.xlane.xlu0 %1192
        %v1194 = vsub.f32 %v1188, %v1193
        %v1195 = vmul.f32 %v1194, 1.442695
        %v1196 = vpow.pop %v1195
        %1197 = vrot.lane.b32.xlu0 %v585, 72
        %v1198 = vpop.permute.xlu0 %1197
        %1199 = vrot.lane.b32.xlu0 %v590, 72
        %v1200 = vpop.permute.xlu0 %1199
        %v1204 = vsel %vm674, %v1196, 0
        %1206 = vmatprep.subr.mxu0 0.0
        %1207 = vmatpush1.msra.mxu0 %v1198
        %1208 = vmatprep.subr.mxu0 0.0
        %1209 = vmatpush1.msra.mxu0 %v1200
        %1210 = vmatprep.subr.mxu0 0.0
        %1211 = vmatpush1.msra.mxu0 0.0
        %1212 = vmatprep.subr.mxu0 0.0
        %1213 = vmatpush1.msra.mxu0 0.0
        %1214 = vmatprep.subr.mxu0 0.0
        %1215 = vmatpush1.msra.mxu0 0.0
        %1216 = vmatprep.subr.mxu0 0.0
        %1217 = vmatpush1.msra.mxu0 0.0
        %1218 = vmatprep.subr.mxu0 0.0
        %1219 = vmatpush1.msra.mxu0 0.0
        %1220 = vmatprep.subr.mxu0 0.0
        %1221 = vmatpush1.msra.mxu0 0.0
        %1222 = vmatprep.subr.mxu0 0.0
        %1223 = vmatpush1.msra.mxu0 0.0
        %1224 = vmatprep.subr.mxu0 0.0
        %1225 = vmatpush1.msra.mxu0 0.0
        %1226 = vmatprep.subr.mxu0 0.0
        %1227 = vmatpush1.msra.mxu0 0.0
        %1228 = vmatprep.subr.mxu0 0.0
        %1229 = vmatpush1.msra.mxu0 0.0
        %1230 = vmatprep.subr.mxu0 0.0
        %1231 = vmatpush1.msra.mxu0 0.0
        %1232 = vmatprep.subr.mxu0 0.0
        %1233 = vmatpush1.msra.mxu0 0.0
        %1234 = vmatprep.subr.mxu0 0.0
        %1235 = vmatpush1.msra.mxu0 0.0
        %1236 = vmatprep.subr.mxu0 0.0
        %1237 = vmatpush1.msra.mxu0 0.0
        %1238 = vmatprep.subr.mxu0 0.0
        %1239 = vmatpush1.msra.mxu0 0.0
        %1240 = vmatprep.subr.mxu0 0.0
        %1241 = vmatpush1.msra.mxu0 0.0
        %1242 = vmatprep.subr.mxu0 0.0
        %1243 = vmatpush1.msra.mxu0 0.0
        %1244 = vmatprep.subr.mxu0 0.0
        %1245 = vmatpush1.msra.mxu0 0.0
        %1246 = vmatprep.subr.mxu0 0.0
        %1247 = vmatpush1.msra.mxu0 0.0
        %1248 = vmatprep.subr.mxu0 0.0
        %1249 = vmatpush1.msra.mxu0 0.0
        %1250 = vmatprep.subr.mxu0 0.0
        %1251 = vmatpush1.msra.mxu0 0.0
        %1252 = vmatprep.subr.mxu0 0.0
        %1253 = vmatpush1.msra.mxu0 0.0
        %1254 = vmatprep.subr.mxu0 0.0
        %1255 = vmatpush1.msra.mxu0 0.0
        %1256 = vmatprep.subr.mxu0 0.0
        %1257 = vmatpush1.msra.mxu0 0.0
        %1258 = vmatprep.subr.mxu0 0.0
        %1259 = vmatpush1.msra.mxu0 0.0
        %1260 = vmatprep.subr.mxu0 0.0
        %1261 = vmatpush1.msra.mxu0 0.0
        %1262 = vmatprep.subr.mxu0 0.0
        %1263 = vmatpush1.msra.mxu0 0.0
        %1264 = vmatprep.subr.mxu0 0.0
        %1265 = vmatpush1.msra.mxu0 0.0
        %1266 = vmatprep.subr.mxu0 0.0
        %1267 = vmatpush1.msra.mxu0 0.0
        %1268 = vmatprep.subr.mxu0 0.0
        %1269 = vmatpush1.msra.mxu0 0.0
        %1270 = vmatprep.mubr.f32.mxu0 0.0
        %1271 = vmatmul.mubr.f32.gmra.mrb[0].mxu0 %v1204
        %v1272 = vpop.f32.mrb[0].mxu0
        %v1273 = vadd.f32 0.0, %v1272
        %v1274 = vpop.f32.mrb[0].mxu0
        %1275 = vdwg.mxu0
        %v1276 = vsel %vm674, %v1196, 0.0
        %1277 = vadd.xlane.f32.xlu0 %v1276
        %v1278 = vpop.xlane.xlu0 %1277
        %v1279 = vrcp.pop %v1278
        %v1280 = vmul.f32 %v1273, %v1279
        %1282 = vrot.lane.b32.xlu0 %v936, 8
        %v1283 = vpop.permute.xlu0 %1282
        %1286 = vrot.lane.b32.xlu0 %v1108, 16
        %v1287 = vpop.permute.xlu0 %1286
        %1290 = vrot.lane.b32.xlu0 %v1280, 24
        %v1291 = vpop.permute.xlu0 %1290
        %v1293 = vsel %vm594, %v764, %v1283
        %v1294 = vsel %vm674, %v1293, %v1287
        %vm1295 = vcmask 195584
        %v1296 = vsel %vm1295, %v1294, %v1291
        %v1297 = vadd.f32 %v496, %v1296
        %v1298 = vld [vmem:[#allocation10] sm:$0xff]
        %v1299 = vld [vmem:[#allocation10 + $0x8] sm:$0xff]
        %v1300 = vld [vmem:[#allocation10 + $0x10] sm:$0xff]
        %v1301 = vld [vmem:[#allocation10 + $0x18] sm:$0xff]
        %v1302 = vld [vmem:[%s7] sm:$0x1]
        %v1304 = vlaneseq
        %v1305 = vshrl.u32 %v1304, 7
        %v1306 = vsub.s32 0, %v1305
        %v1307 = vrot.slane %v1302, %v1306
        %v1310 = vsel %vm425, %v1297, 0
        %1312 = vmatprep.subr.mxu0 0.0
        %1313 = vmatpush1.msra.mxu0 %v1298
        %1314 = vmatprep.subr.mxu0 0.0
        %1315 = vmatpush1.msra.mxu0 %v1299
        %1316 = vmatprep.subr.mxu0 0.0
        %1317 = vmatpush1.msra.mxu0 %v1300
        %1318 = vmatprep.subr.mxu0 0.0
        %1319 = vmatpush1.msra.mxu0 %v1301
        %1320 = vmatprep.subr.mxu0 0.0
        %1321 = vmatpush1.msra.mxu0 0.0
        %1322 = vmatprep.subr.mxu0 0.0
        %1323 = vmatpush1.msra.mxu0 0.0
        %1324 = vmatprep.subr.mxu0 0.0
        %1325 = vmatpush1.msra.mxu0 0.0
        %1326 = vmatprep.subr.mxu0 0.0
        %1327 = vmatpush1.msra.mxu0 0.0
        %1328 = vmatprep.subr.mxu0 0.0
        %1329 = vmatpush1.msra.mxu0 0.0
        %1330 = vmatprep.subr.mxu0 0.0
        %1331 = vmatpush1.msra.mxu0 0.0
        %1332 = vmatprep.subr.mxu0 0.0
        %1333 = vmatpush1.msra.mxu0 0.0
        %1334 = vmatprep.subr.mxu0 0.0
        %1335 = vmatpush1.msra.mxu0 0.0
        %1336 = vmatprep.subr.mxu0 0.0
        %1337 = vmatpush1.msra.mxu0 0.0
        %1338 = vmatprep.subr.mxu0 0.0
        %1339 = vmatpush1.msra.mxu0 0.0
        %1340 = vmatprep.subr.mxu0 0.0
        %1341 = vmatpush1.msra.mxu0 0.0
        %1342 = vmatprep.subr.mxu0 0.0
        %1343 = vmatpush1.msra.mxu0 0.0
        %1344 = vmatprep.subr.mxu0 0.0
        %1345 = vmatpush1.msra.mxu0 0.0
        %1346 = vmatprep.subr.mxu0 0.0
        %1347 = vmatpush1.msra.mxu0 0.0
        %1348 = vmatprep.subr.mxu0 0.0
        %1349 = vmatpush1.msra.mxu0 0.0
        %1350 = vmatprep.subr.mxu0 0.0
        %1351 = vmatpush1.msra.mxu0 0.0
        %1352 = vmatprep.subr.mxu0 0.0
        %1353 = vmatpush1.msra.mxu0 0.0
        %1354 = vmatprep.subr.mxu0 0.0
        %1355 = vmatpush1.msra.mxu0 0.0
        %1356 = vmatprep.subr.mxu0 0.0
        %1357 = vmatpush1.msra.mxu0 0.0
        %1358 = vmatprep.subr.mxu0 0.0
        %1359 = vmatpush1.msra.mxu0 0.0
        %1360 = vmatprep.subr.mxu0 0.0
        %1361 = vmatpush1.msra.mxu0 0.0
        %1362 = vmatprep.subr.mxu0 0.0
        %1363 = vmatpush1.msra.mxu0 0.0
        %1364 = vmatprep.subr.mxu0 0.0
        %1365 = vmatpush1.msra.mxu0 0.0
        %1366 = vmatprep.subr.mxu0 0.0
        %1367 = vmatpush1.msra.mxu0 0.0
        %1368 = vmatprep.subr.mxu0 0.0
        %1369 = vmatpush1.msra.mxu0 0.0
        %1370 = vmatprep.subr.mxu0 0.0
        %1371 = vmatpush1.msra.mxu0 0.0
        %1372 = vmatprep.subr.mxu0 0.0
        %1373 = vmatpush1.msra.mxu0 0.0
        %1374 = vmatprep.subr.mxu0 0.0
        %1375 = vmatpush1.msra.mxu0 0.0
        %1376 = vmatprep.mubr.f32.mxu0 0.0
        %1377 = vmatmul.mubr.f32.gmra.mrb[0].mxu0 %v1310
        %v1378 = vpop.f32.mrb[0].mxu0
        %v1379 = vadd.f32 %v1307, %v1378
        %v1380 = vpop.f32.mrb[0].mxu0
        %1381 = vdwg.mxu0
        %v1382 = vmax.f32 %v1379, 0.0
        %v1383 = vadd.f32 %v1297, %v1382
        %1384 = vst.msk [vmem:[%s411] sm:$0xff] %vm425, %v1383
        %s1385 = sand.u32 %s236, 1
        %s1386 = scalar_lea.sflag [#allocation4], %s1385
        %s1387 = sand.u32 %s236, 1
        %s1388 = smul.addr %s1387, 8
        %s1389 = scalar_lea.vmem [#allocation11], %s1388
        // Predicated region
        $region73: #{tpu_custom_call.1} parent=51 // pred_check
          %p1390 = pneg %p246
        $region74: #{tpu_custom_call.1} parent=51 // pred_check_branch
          %1392 = sbr.rel (%p1390) target = $region76
        $region75: #{tpu_custom_call.1} parent=51 // pred_region
          %s1394 = ssub.s32 128, 128
          %1395 = vsyncadd %s1386, %s1394
          %s1396 = sadd.s32 %s33, %s32
          %s1397 = smul.addr %s1396, 128
          %s1398 = scalar_lea.hbm %s8, %s1397
          %s1400 = sshll.u32 %s1389, 4
          %s1401 = int_to_ptr.vmem [resolvable:$true] %s1400
          %1403 = dma.vmem_to_hbm [thread:$0]  %s1401, 128, %s1398, %s1386
        $region76: #{tpu_custom_call.1} parent=51 // pred_fallthru
          _
      $region52: #{tpu_custom_call.1} parent=5 // pred_fallthru
        _
      %p1404 = scmp.le.s32.totalorder 2, %s22
      // Predicated region
      $region77: #{tpu_custom_call.1} parent=5 // pred_check
        %p1405 = pneg %p1404
      $region78: #{tpu_custom_call.1} parent=5 // pred_check_branch
        %1407 = sbr.rel (%p1405) target = $region80
      $region79: #{tpu_custom_call.1} parent=5 // pred_region
        %s1408 = ssub.s32 %s22, 2
        // Predicated region
        $region81: #{tpu_custom_call.1} parent=79 // pred_check
          %p1409 = pneg %p252
        $region82: #{tpu_custom_call.1} parent=79 // pred_check_branch
          %1411 = sbr.rel (%p1409) target = $region84
        $region83: #{tpu_custom_call.1} parent=79 // pred_region
          %s1412 = sand.u32 %s237, 1
          %s1413 = scalar_lea.sflag [#allocation4], %s1412
          %s1414 = sand.u32 %s237, 1
          %s1415 = smul.addr %s1414, 8
          %s1416 = scalar_lea.vmem [#allocation11], %s1415
          %1417 = dma.done %s1413, 128
        $region84: #{tpu_custom_call.1} parent=79 // pred_fallthru
          _
      $region80: #{tpu_custom_call.1} parent=5 // pred_fallthru
        _
    $region6: #{tpu_custom_call.1} parent=1 // loop_footer
      %s26 = sadd.s32 1, %s22
    $region7: #{tpu_custom_call.1} parent=1 // loop_footer_branch
      %21 = sbr.rel target = $region3
    $region8: #{tpu_custom_call.1} parent=1 // loop_exit
      _
    %1418 = vsyncpa [#allocation3], 1
    %s1419 = scalar_lea.sflag [#allocation3], 1
    %1420 = vsyncpa %s1419, 1
    %1421 = vsyncpa [#allocation6], 1
    %s1422 = scalar_lea.sflag [#allocation6], 1
    %1423 = vsyncpa %s1422, 1
    %1424 = vsyncpa [#allocation9], 1
    %1425 = vsyncpa [#allocation4], 1
    %s1426 = scalar_lea.sflag [#allocation4], 1
    %1427 = vsyncpa %s1426, 1

</llo_original>
